<compile_context>
chip_gen: v6e
topology: v6e:2x2x1
jax: 0.10.0
libtpu: 0.0.40
codegen_flags: <defaults>
</compile_context>

<pallas_src>
import numpy as np

import jax
import jax.numpy as jnp
from jax.experimental import pallas as pl
from jax.experimental.pallas import tpu as pltpu


def _spectral_mix_kernel(xr_ref, xi_ref, wr_ref, wi_ref, or_ref, oi_ref):
    """One grid step = one block of Fourier modes.

    xr_ref/xi_ref : [mb, B, Cin]    real / imag of x_ft, modes-major
    wr_ref/wi_ref : [mb, Cin, Cout] real / imag of the complex weights
    or_ref/oi_ref : [mb, B, Cout]   real / imag of the mixed modes
    """
    xr = xr_ref[...]
    xi = xi_ref[...]
    wr = wr_ref[...]
    wi = wi_ref[...]
    # Four batched (over modes) MXU matmuls with f32 accumulation; each VMEM
    # weight tile is DMA'd once per mode block and reused twice.
    rr = jnp.einsum("mbi,mio->mbo", xr, wr, preferred_element_type=jnp.float32)
    ii = jnp.einsum("mbi,mio->mbo", xi, wi, preferred_element_type=jnp.float32)
    ri = jnp.einsum("mbi,mio->mbo", xr, wi, preferred_element_type=jnp.float32)
    ir = jnp.einsum("mbi,mio->mbo", xi, wr, preferred_element_type=jnp.float32)
    or_ref[...] = (rr - ii).astype(or_ref.dtype)   # Re[(xr + i xi)(wr + i wi)]
    oi_ref[...] = (ri + ir).astype(oi_ref.dtype)   # Im[(xr + i xi)(wr + i wi)]


def _vmem_budget_bytes():
    """Generation-aware VMEM budget (also used as vmem_limit_bytes)."""
    cap = 64 * 1024 * 1024                       # conservative fallback (v7x per-TC)
    try:
        info = pltpu.get_tpu_info()
        cap = int(getattr(info, "vmem_capacity_bytes", cap)) or cap
    except Exception:
        pass
    # v5e/v6e (128 MiB physical): ~96 MiB.  v7x (64 MiB per TC): ~48 MiB.
    want = 96 * 1024 * 1024 if cap >= 100 * 1024 * 1024 else 48 * 1024 * 1024
    return min(want, (cap * 3) // 4)


def _pick_mode_block(modes, per_mode_bytes, vmem_budget_bytes):
    """Largest power-of-two mode block whose tiles fit the VMEM budget."""
    mb = 1024
    while mb > 8 and mb * per_mode_bytes > (vmem_budget_bytes * 3) // 4:
        mb //= 2
    # Don't allocate far past the real spectrum; keep >= 2 mode blocks when the
    # mode count allows so v7x's second TensorCore gets real (balanced) work.
    if modes >= 16:
        mb = min(mb, pl.next_power_of_2(pl.cdiv(modes, 2)))
    else:
        mb = min(mb, pl.next_power_of_2(max(modes, 1)))
    return max(int(mb), 1)


def spectral_conv1d(x, w_real, w_imag, modes, *, mode_block=None,
                    compute_dtype=jnp.float32):
    """Forward pass of SpectralConv1d.

    x       : [B, Cin, N] float32
    w_real  : [Cin, Cout, modes] float32  (real part of complex weights)
    w_imag  : [Cin, Cout, modes] float32  (imag part of complex weights)
    returns : [B, Cout, N] float32
    """
    B, Cin, N = x.shape
    Cout = w_real.shape[1]
    n_freq = N // 2 + 1
    if modes > n_freq:
        raise ValueError(f"modes={modes} exceeds rfft length {n_freq}")
    if w_real.shape != (Cin, Cout, modes) or w_imag.shape != (Cin, Cout, modes):
        raise ValueError("weight shape mismatch")

    # ---- FFT (plain-JAX glue) ---------------------------------------------
    x_ft = jnp.fft.rfft(x, axis=-1)[:, :, :modes]            # [B, Cin, M] c64
    xr = jnp.real(x_ft).astype(jnp.float32)
    xi = jnp.imag(x_ft).astype(jnp.float32)

    # ---- pad batch to whole sublanes (MXU M dimension) ---------------------
    B2 = ((B + 7) // 8) * 8
    if B2 != B:
        xr = jnp.pad(xr, ((0, B2 - B), (0, 0), (0, 0)))
        xi = jnp.pad(xi, ((0, B2 - B), (0, 0), (0, 0)))

    # ---- modes-major operand layouts ---------------------------------------
    xr_t = jnp.transpose(xr, (2, 0, 1))                       # [M, B2, Cin]
    xi_t = jnp.transpose(xi, (2, 0, 1))
    wr_t = jnp.transpose(w_real, (2, 0, 1)).astype(jnp.float32)   # [M, Cin, Cout]
    wi_t = jnp.transpose(w_imag, (2, 0, 1)).astype(jnp.float32)

    in_dtype = np.dtype(compute_dtype)
    if in_dtype != np.dtype(jnp.float32):
        # Cast BEFORE the DMA: halves HBM->VMEM traffic (bf16 MXU operands),
        # accumulation stays f32 inside the kernel.
        xr_t = xr_t.astype(compute_dtype)
        xi_t = xi_t.astype(compute_dtype)
        wr_t = wr_t.astype(compute_dtype)
        wi_t = wi_t.astype(compute_dtype)

    # ---- tile size from the generation-aware VMEM budget --------------------
    budget = _vmem_budget_bytes()
    itemsize = in_dtype.itemsize
    per_mode = (2 * 2 * B2 * Cin * itemsize        # xr + xi tiles, double-buffered
                + 2 * 2 * Cin * Cout * itemsize    # wr + wi tiles, double-buffered
                + 2 * 2 * B2 * Cout * 4            # or + oi tiles, double-buffered
                + 4 * B2 * Cout * 4)               # matmul partials (f32)
    mb = mode_block if mode_block is not None else _pick_mode_block(
        modes, per_mode, budget)
    n_blocks = pl.cdiv(modes, mb)
    m_pad = n_blocks * mb

    # Zero-pad the (small) partial mode block: zero inputs -> zero outputs,
    # and those padded modes are dropped below anyway.
    if m_pad != modes:
        padm = ((0, m_pad - modes), (0, 0), (0, 0))
        xr_t = jnp.pad(xr_t, padm)
        xi_t = jnp.pad(xi_t, padm)
        wr_t = jnp.pad(wr_t, padm)
        wi_t = jnp.pad(wi_t, padm)

    flops = 8 * m_pad * B2 * Cin * Cout            # 4 matmuls, 2 flops / MAC
    bytes_accessed = int((xr_t.size + xi_t.size + wr_t.size + wi_t.size) * itemsize
                         + 2 * m_pad * B2 * Cout * 4)

    x_map = lambda m: (m, 0, 0)
    out_r, out_i = pl.pallas_call(
        _spectral_mix_kernel,
        out_shape=(jax.ShapeDtypeStruct((m_pad, B2, Cout), jnp.float32),
                   jax.ShapeDtypeStruct((m_pad, B2, Cout), jnp.float32)),
        grid=(n_blocks,),
        in_specs=[pl.BlockSpec((mb, B2, Cin), x_map),
                  pl.BlockSpec((mb, B2, Cin), x_map),
                  pl.BlockSpec((mb, Cin, Cout), x_map),
                  pl.BlockSpec((mb, Cin, Cout), x_map)],
        out_specs=(pl.BlockSpec((mb, B2, Cout), x_map),
                   pl.BlockSpec((mb, B2, Cout), x_map)),
        compiler_params=pltpu.CompilerParams(
            dimension_semantics=("parallel",),     # v7x: shard mode blocks over 2 TCs
            vmem_limit_bytes=budget),
        cost_estimate=pl.CostEstimate(
            flops=flops, transcendentals=0, bytes_accessed=bytes_accessed),
    )(xr_t, xi_t, wr_t, wi_t)

    # ---- unpack: drop mode/batch padding, back to [B, Cout, modes] ----------
    o_r = jnp.transpose(out_r[:modes, :B, :], (1, 2, 0))
    o_i = jnp.transpose(out_i[:modes, :B, :], (1, 2, 0))
    out_ft = (o_r + 1j * o_i).astype(jnp.complex64)
    # Zero-extend the untouched high-frequency modes with one fused XLA pad.
    out_ft = jnp.pad(out_ft, ((0, 0), (0, 0), (0, n_freq - modes)))
    return jnp.fft.irfft(out_ft, n=N, axis=-1).astype(x.dtype)


def _reference(x, w_real, w_imag, modes):
    """Pure-JAX reference mirroring the PyTorch forward."""
    N = x.shape[-1]
    n_freq = N // 2 + 1
    x_ft = jnp.fft.rfft(x, axis=-1)
    w = w_real.astype(jnp.complex64) + 1j * w_imag.astype(jnp.complex64)
    out_modes = jnp.einsum("bix,iox->box", x_ft[:, :, :modes], w)
    out_ft = jnp.pad(out_modes, ((0, 0), (0, 0), (0, n_freq - modes)))
    return jnp.fft.irfft(out_ft, n=N, axis=-1)


if __name__ == "__main__":
    # Module config (matches SpectralConv1d(in_channels, out_channels, modes)).
    batch = 2
    in_channels = 4
    out_channels = 4
    spatial = 16
    modes = 8  # <= spatial // 2 + 1

    key = jax.random.PRNGKey(0)
    kx, kwr, kwi = jax.random.split(key, 3)

    # Input [batch, in_channels, spatial].
    x = jax.random.normal(kx, (batch, in_channels, spatial), dtype=jnp.float32)

    # Deterministic weight init: scale * U[0,1) for real and imag parts,
    # mirroring `scale * torch.rand(..., dtype=torch.cfloat)`.
    scale = 1.0 / (in_channels * out_channels)
    w_real = scale * jax.random.uniform(
        kwr, (in_channels, out_channels, modes), dtype=jnp.float32)
    w_imag = scale * jax.random.uniform(
        kwi, (in_channels, out_channels, modes), dtype=jnp.float32)

    out = jax.block_until_ready(spectral_conv1d(x, w_real, w_imag, modes))
    ref = jax.block_until_ready(_reference(x, w_real, w_imag, modes))

    assert out.shape == (batch, out_channels, spatial), out.shape
    assert jnp.allclose(out, ref, atol=1e-5, rtol=1e-5), "mismatch vs reference"

    print("KERNEL_OK")
</pallas_src>

<mosaic_0001>
module attributes {stable_mosaic.version = 11 : i64} {
  func.func @_spectral_mix_kernel(%arg0: i32, %arg1: memref<8x8x4xf32, #tpu.memory_space<vmem>>, %arg2: memref<8x8x4xf32, #tpu.memory_space<vmem>>, %arg3: memref<8x4x4xf32, #tpu.memory_space<vmem>>, %arg4: memref<8x4x4xf32, #tpu.memory_space<vmem>>, %arg5: memref<8x8x4xf32, #tpu.memory_space<vmem>>, %arg6: memref<8x8x4xf32, #tpu.memory_space<vmem>>) attributes {dimension_semantics = [#tpu.dimension_semantics<parallel>], iteration_bounds = array<i64: 1>, scalar_prefetch = 0 : i64, scratch_operands = 0 : i64, tpu.core_type = #tpu.core_type<tc>, window_params = [{transform_indices = @transform_0, window_bounds = array<i64: 8, 8, 4>}, {transform_indices = @transform_1, window_bounds = array<i64: 8, 8, 4>}, {transform_indices = @transform_2, window_bounds = array<i64: 8, 4, 4>}, {transform_indices = @transform_3, window_bounds = array<i64: 8, 4, 4>}, {transform_indices = @transform_4, window_bounds = array<i64: 8, 8, 4>}, {transform_indices = @transform_5, window_bounds = array<i64: 8, 8, 4>}]} {
    %c0 = arith.constant 0 : index
    %c0_0 = arith.constant 0 : index
    %c0_1 = arith.constant 0 : index
    %0 = vector.load %arg1[%c0, %c0_0, %c0_1] : memref<8x8x4xf32, #tpu.memory_space<vmem>>, vector<8x8x4xf32>
    %c0_2 = arith.constant 0 : index
    %c0_3 = arith.constant 0 : index
    %c0_4 = arith.constant 0 : index
    %1 = vector.load %arg2[%c0_2, %c0_3, %c0_4] : memref<8x8x4xf32, #tpu.memory_space<vmem>>, vector<8x8x4xf32>
    %c0_5 = arith.constant 0 : index
    %c0_6 = arith.constant 0 : index
    %c0_7 = arith.constant 0 : index
    %2 = vector.load %arg3[%c0_5, %c0_6, %c0_7] : memref<8x4x4xf32, #tpu.memory_space<vmem>>, vector<8x4x4xf32>
    %c0_8 = arith.constant 0 : index
    %c0_9 = arith.constant 0 : index
    %c0_10 = arith.constant 0 : index
    %3 = vector.load %arg4[%c0_8, %c0_9, %c0_10] : memref<8x4x4xf32, #tpu.memory_space<vmem>>, vector<8x4x4xf32>
    "tpu.trace_start"() <{level = 10 : i32, message = "mbi,mio->mbo"}> : () -> ()
    %cst = arith.constant dense<0.000000e+00> : vector<8x8x4xf32>
    %4 = tpu.matmul %0, %2, %cst {dimension_numbers = #tpu.dot_dimension_numbers<[2], [1], [1], [2], [0, 0, 0, 1, 1, 2], [0], [0]>} : vector<8x8x4xf32>, vector<8x4x4xf32>, vector<8x8x4xf32> -> vector<8x8x4xf32>
    %cst_11 = arith.constant dense<0.000000e+00> : vector<8x8x4xf32>
    %5 = tpu.matmul %1, %3, %cst_11 {dimension_numbers = #tpu.dot_dimension_numbers<[2], [1], [1], [2], [0, 0, 0, 1, 1, 2], [0], [0]>} : vector<8x8x4xf32>, vector<8x4x4xf32>, vector<8x8x4xf32> -> vector<8x8x4xf32>
    %cst_12 = arith.constant dense<0.000000e+00> : vector<8x8x4xf32>
    %6 = tpu.matmul %0, %3, %cst_12 {dimension_numbers = #tpu.dot_dimension_numbers<[2], [1], [1], [2], [0, 0, 0, 1, 1, 2], [0], [0]>} : vector<8x8x4xf32>, vector<8x4x4xf32>, vector<8x8x4xf32> -> vector<8x8x4xf32>
    %cst_13 = arith.constant dense<0.000000e+00> : vector<8x8x4xf32>
    %7 = tpu.matmul %1, %2, %cst_13 {dimension_numbers = #tpu.dot_dimension_numbers<[2], [1], [1], [2], [0, 0, 0, 1, 1, 2], [0], [0]>} : vector<8x8x4xf32>, vector<8x4x4xf32>, vector<8x8x4xf32> -> vector<8x8x4xf32>
    "tpu.trace_stop"() : () -> ()
    %8 = arith.subf %4, %5 : vector<8x8x4xf32>
    %c0_14 = arith.constant 0 : index
    %c0_15 = arith.constant 0 : index
    %c0_16 = arith.constant 0 : index
    %9 = vector.load %arg5[%c0_14, %c0_15, %c0_16] : memref<8x8x4xf32, #tpu.memory_space<vmem>>, vector<8x8x4xf32>
    tpu.vector_store %arg5[%c0_14, %c0_15, %c0_16], %8 {strides = array<i32>} : memref<8x8x4xf32, #tpu.memory_space<vmem>>, vector<8x8x4xf32>,
    %10 = arith.addf %6, %7 : vector<8x8x4xf32>
    %c0_17 = arith.constant 0 : index
    %c0_18 = arith.constant 0 : index
    %c0_19 = arith.constant 0 : index
    %11 = vector.load %arg6[%c0_17, %c0_18, %c0_19] : memref<8x8x4xf32, #tpu.memory_space<vmem>>, vector<8x8x4xf32>
    tpu.vector_store %arg6[%c0_17, %c0_18, %c0_19], %10 {strides = array<i32>} : memref<8x8x4xf32, #tpu.memory_space<vmem>>, vector<8x8x4xf32>,
    return
  }
  func.func @transform_0(%arg0: i32) -> (i32, i32, i32) {
    %c0_i32 = arith.constant 0 : i32
    %c0_i32_0 = arith.constant 0 : i32
    %c0_i32_1 = arith.constant 0 : i32
    return %arg0, %c0_i32, %c0_i32_0 : i32, i32, i32
  }
  func.func @transform_1(%arg0: i32) -> (i32, i32, i32) {
    %c0_i32 = arith.constant 0 : i32
    %c0_i32_0 = arith.constant 0 : i32
    %c0_i32_1 = arith.constant 0 : i32
    return %arg0, %c0_i32, %c0_i32_0 : i32, i32, i32
  }
  func.func @transform_2(%arg0: i32) -> (i32, i32, i32) {
    %c0_i32 = arith.constant 0 : i32
    %c0_i32_0 = arith.constant 0 : i32
    %c0_i32_1 = arith.constant 0 : i32
    return %arg0, %c0_i32, %c0_i32_0 : i32, i32, i32
  }
  func.func @transform_3(%arg0: i32) -> (i32, i32, i32) {
    %c0_i32 = arith.constant 0 : i32
    %c0_i32_0 = arith.constant 0 : i32
    %c0_i32_1 = arith.constant 0 : i32
    return %arg0, %c0_i32, %c0_i32_0 : i32, i32, i32
  }
  func.func @transform_4(%arg0: i32) -> (i32, i32, i32) {
    %c0_i32 = arith.constant 0 : i32
    %c0_i32_0 = arith.constant 0 : i32
    %c0_i32_1 = arith.constant 0 : i32
    return %arg0, %c0_i32, %c0_i32_0 : i32, i32, i32
  }
  func.func @transform_5(%arg0: i32) -> (i32, i32, i32) {
    %c0_i32 = arith.constant 0 : i32
    %c0_i32_0 = arith.constant 0 : i32
    %c0_i32_1 = arith.constant 0 : i32
    return %arg0, %c0_i32, %c0_i32_0 : i32, i32, i32
  }
}

</mosaic_0001>

<llo_original>
// kernel: tpu_custom_call.1
$region0: #{tpu_custom_call.1}
  #allocation0 [shape = 'u32[]', space=smem, size = 0x4, offset = 0x4, fixed_abs, tag = 'smem constant byte address 0x4 - core index']
  #allocation1 [shape = 'u32[144,128]{1,0:T(1,128)}', space=vmem, size = 0x12000, scoped, tag = 'internal scratch']
  %s0 = inlined_call_operand.vmem [shape: f32[8,8,4], index: 0, kind: input, shape index: {}]
  %s1 = inlined_call_operand.vmem [shape: f32[8,8,4], index: 1, kind: input, shape index: {}]
  %s2 = inlined_call_operand.vmem [shape: f32[8,4,4], index: 2, kind: input, shape index: {}]
  %s3 = inlined_call_operand.vmem [shape: f32[8,4,4], index: 3, kind: input, shape index: {}]
  %s4 = inlined_call_operand.vmem [shape: f32[8,8,4], index: 4, kind: output, shape index: {0}]
  %s5 = inlined_call_operand.vmem [shape: f32[8,8,4], index: 5, kind: output, shape index: {1}]
  %6 = xla_tuple %s4, %s5
  %s7 = sld [smem:[#allocation0]]
  $region34: #{tpu_custom_call.1} parent=0
    _
  %s9 = ssub.s32 1, %s7
  %s10 = scalar_select 0, %s9, %s7
  // Predicated region
  $region2: #{tpu_custom_call.1} parent=0 // pred_check
    _
  $region3: #{tpu_custom_call.1} parent=0 // pred_check_branch
    %12 = sbr.rel (0) target = $region5
  $region4: #{tpu_custom_call.1} parent=0 // pred_region
    _
  $region5: #{tpu_custom_call.1} parent=0 // pred_fallthru
    _
  // Predicated region
  $region6: #{tpu_custom_call.1} parent=0 // pred_check
    _
  $region7: #{tpu_custom_call.1} parent=0 // pred_check_branch
    %14 = sbr.rel (0) target = $region9
  $region8: #{tpu_custom_call.1} parent=0 // pred_region
    _
  $region9: #{tpu_custom_call.1} parent=0 // pred_fallthru
    _
  // Predicated region
  $region10: #{tpu_custom_call.1} parent=0 // pred_check
    _
  $region11: #{tpu_custom_call.1} parent=0 // pred_check_branch
    %16 = sbr.rel (0) target = $region13
  $region12: #{tpu_custom_call.1} parent=0 // pred_region
    _
  $region13: #{tpu_custom_call.1} parent=0 // pred_fallthru
    _
  // Predicated region
  $region14: #{tpu_custom_call.1} parent=0 // pred_check
    _
  $region15: #{tpu_custom_call.1} parent=0 // pred_check_branch
    %18 = sbr.rel (0) target = $region17
  $region16: #{tpu_custom_call.1} parent=0 // pred_region
    _
  $region17: #{tpu_custom_call.1} parent=0 // pred_fallthru
    _
  %v19 = vld [vmem:[%s0] sm:$0xff]
  %v20 = vld [vmem:[%s0 + $0x8] sm:$0xff]
  %v21 = vld [vmem:[%s0 + $0x10] sm:$0xff]
  %v22 = vld [vmem:[%s0 + $0x18] sm:$0xff]
  %v23 = vld [vmem:[%s0 + $0x20] sm:$0xff]
  %v24 = vld [vmem:[%s0 + $0x28] sm:$0xff]
  %v25 = vld [vmem:[%s0 + $0x30] sm:$0xff]
  %v26 = vld [vmem:[%s0 + $0x38] sm:$0xff]
  %v27 = vld [vmem:[%s1] sm:$0xff]
  %v28 = vld [vmem:[%s1 + $0x8] sm:$0xff]
  %v29 = vld [vmem:[%s1 + $0x10] sm:$0xff]
  %v30 = vld [vmem:[%s1 + $0x18] sm:$0xff]
  %v31 = vld [vmem:[%s1 + $0x20] sm:$0xff]
  %v32 = vld [vmem:[%s1 + $0x28] sm:$0xff]
  %v33 = vld [vmem:[%s1 + $0x30] sm:$0xff]
  %v34 = vld [vmem:[%s1 + $0x38] sm:$0xff]
  %v35 = vld [vmem:[%s2] sm:$0xf]
  %v36 = vld [vmem:[%s2 + $0x4] sm:$0xf]
  %v37 = vld [vmem:[%s2 + $0x8] sm:$0xf]
  %v38 = vld [vmem:[%s2 + $0xc] sm:$0xf]
  %v39 = vld [vmem:[%s2 + $0x10] sm:$0xf]
  %v40 = vld [vmem:[%s2 + $0x14] sm:$0xf]
  %v41 = vld [vmem:[%s2 + $0x18] sm:$0xf]
  %v42 = vld [vmem:[%s2 + $0x1c] sm:$0xf]
  %v43 = vld [vmem:[%s3] sm:$0xf]
  %v44 = vld [vmem:[%s3 + $0x4] sm:$0xf]
  %v45 = vld [vmem:[%s3 + $0x8] sm:$0xf]
  %v46 = vld [vmem:[%s3 + $0xc] sm:$0xf]
  %v47 = vld [vmem:[%s3 + $0x10] sm:$0xf]
  %v48 = vld [vmem:[%s3 + $0x14] sm:$0xf]
  %v49 = vld [vmem:[%s3 + $0x18] sm:$0xf]
  %v50 = vld [vmem:[%s3 + $0x1c] sm:$0xf]
  %vm51 = vcmask 31744
  %v53 = vsel %vm51, %v19, 0
  %vm55 = vcmask 1043456
  %v57 = vsel %vm55, %v35, 0
  %59 = vmatprep.subr.mxu0 0.0
  %60 = vmatpush1.msra.mxu0 0.0
  %61 = vmatprep.subr.mxu0 0.0
  %62 = vmatpush1.msra.mxu0 0.0
  %63 = vmatprep.subr.mxu0 0.0
  %64 = vmatpush1.msra.mxu0 0.0
  %65 = vmatprep.subr.mxu0 0.0
  %66 = vmatpush1.msra.mxu0 0.0
  %67 = vmatprep.subr.mxu0 0.0
  %68 = vmatpush1.msra.mxu0 0.0
  %69 = vmatprep.subr.mxu0 0.0
  %70 = vmatpush1.msra.mxu0 0.0
  %71 = vmatprep.subr.mxu0 0.0
  %72 = vmatpush1.msra.mxu0 0.0
  %73 = vmatprep.subr.mxu0 0.0
  %74 = vmatpush1.msra.mxu0 0.0
  %75 = vmatprep.subr.mxu0 0.0
  %76 = vmatpush1.msra.mxu0 0.0
  %77 = vmatprep.subr.mxu0 0.0
  %78 = vmatpush1.msra.mxu0 0.0
  %79 = vmatprep.subr.mxu0 0.0
  %80 = vmatpush1.msra.mxu0 0.0
  %81 = vmatprep.subr.mxu0 0.0
  %82 = vmatpush1.msra.mxu0 0.0
  %83 = vmatprep.subr.mxu0 0.0
  %84 = vmatpush1.msra.mxu0 0.0
  %85 = vmatprep.subr.mxu0 0.0
  %86 = vmatpush1.msra.mxu0 0.0
  %87 = vmatprep.subr.mxu0 0.0
  %88 = vmatpush1.msra.mxu0 0.0
  %89 = vmatprep.subr.mxu0 0.0
  %90 = vmatpush1.msra.mxu0 %v57
  %91 = vmatprep.subr.mxu0 0.0
  %92 = vmatpush2.msra.mxu0 0.0
  %93 = vmatprep.subr.mxu0 0.0
  %94 = vmatpush2.msra.mxu0 0.0
  %95 = vmatprep.subr.mxu0 0.0
  %96 = vmatpush2.msra.mxu0 0.0
  %97 = vmatprep.subr.mxu0 0.0
  %98 = vmatpush2.msra.mxu0 0.0
  %99 = vmatprep.subr.mxu0 0.0
  %100 = vmatpush2.msra.mxu0 0.0
  %101 = vmatprep.subr.mxu0 0.0
  %102 = vmatpush2.msra.mxu0 0.0
  %103 = vmatprep.subr.mxu0 0.0
  %104 = vmatpush2.msra.mxu0 0.0
  %105 = vmatprep.subr.mxu0 0.0
  %106 = vmatpush2.msra.mxu0 0.0
  %107 = vmatprep.subr.mxu0 0.0
  %108 = vmatpush2.msra.mxu0 0.0
  %109 = vmatprep.subr.mxu0 0.0
  %110 = vmatpush2.msra.mxu0 0.0
  %111 = vmatprep.subr.mxu0 0.0
  %112 = vmatpush2.msra.mxu0 0.0
  %113 = vmatprep.subr.mxu0 0.0
  %114 = vmatpush2.msra.mxu0 0.0
  %115 = vmatprep.subr.mxu0 0.0
  %116 = vmatpush2.msra.mxu0 0.0
  %117 = vmatprep.subr.mxu0 0.0
  %118 = vmatpush2.msra.mxu0 0.0
  %119 = vmatprep.subr.mxu0 0.0
  %120 = vmatpush2.msra.mxu0 0.0
  %121 = vmatprep.subr.mxu0 0.0
  %122 = vmatpush2.msra.mxu0 0.0
  %123 = vmatprep.mubr.f32.mxu0 0.0
  %124 = vmatmul.mubr.f32.gmra.mxu0 %v53
  %v125 = vpop.f32.mrf.mxu0
  %v126 = vadd.f32 0.0, %v125
  %v127 = vpop.f32.mrf.mxu0
  %128 = vdwg.mxu0
  %v130 = vsel %vm51, %v20, 0
  %v133 = vsel %vm55, %v36, 0
  %135 = vmatprep.subr.mxu0 0.0
  %136 = vmatpush1.msra.mxu0 0.0
  %137 = vmatprep.subr.mxu0 0.0
  %138 = vmatpush1.msra.mxu0 0.0
  %139 = vmatprep.subr.mxu0 0.0
  %140 = vmatpush1.msra.mxu0 0.0
  %141 = vmatprep.subr.mxu0 0.0
  %142 = vmatpush1.msra.mxu0 0.0
  %143 = vmatprep.subr.mxu0 0.0
  %144 = vmatpush1.msra.mxu0 0.0
  %145 = vmatprep.subr.mxu0 0.0
  %146 = vmatpush1.msra.mxu0 0.0
  %147 = vmatprep.subr.mxu0 0.0
  %148 = vmatpush1.msra.mxu0 0.0
  %149 = vmatprep.subr.mxu0 0.0
  %150 = vmatpush1.msra.mxu0 0.0
  %151 = vmatprep.subr.mxu0 0.0
  %152 = vmatpush1.msra.mxu0 0.0
  %153 = vmatprep.subr.mxu0 0.0
  %154 = vmatpush1.msra.mxu0 0.0
  %155 = vmatprep.subr.mxu0 0.0
  %156 = vmatpush1.msra.mxu0 0.0
  %157 = vmatprep.subr.mxu0 0.0
  %158 = vmatpush1.msra.mxu0 0.0
  %159 = vmatprep.subr.mxu0 0.0
  %160 = vmatpush1.msra.mxu0 0.0
  %161 = vmatprep.subr.mxu0 0.0
  %162 = vmatpush1.msra.mxu0 0.0
  %163 = vmatprep.subr.mxu0 0.0
  %164 = vmatpush1.msra.mxu0 0.0
  %165 = vmatprep.subr.mxu0 0.0
  %166 = vmatpush1.msra.mxu0 %v133
  %167 = vmatprep.subr.mxu0 0.0
  %168 = vmatpush2.msra.mxu0 0.0
  %169 = vmatprep.subr.mxu0 0.0
  %170 = vmatpush2.msra.mxu0 0.0
  %171 = vmatprep.subr.mxu0 0.0
  %172 = vmatpush2.msra.mxu0 0.0
  %173 = vmatprep.subr.mxu0 0.0
  %174 = vmatpush2.msra.mxu0 0.0
  %175 = vmatprep.subr.mxu0 0.0
  %176 = vmatpush2.msra.mxu0 0.0
  %177 = vmatprep.subr.mxu0 0.0
  %178 = vmatpush2.msra.mxu0 0.0
  %179 = vmatprep.subr.mxu0 0.0
  %180 = vmatpush2.msra.mxu0 0.0
  %181 = vmatprep.subr.mxu0 0.0
  %182 = vmatpush2.msra.mxu0 0.0
  %183 = vmatprep.subr.mxu0 0.0
  %184 = vmatpush2.msra.mxu0 0.0
  %185 = vmatprep.subr.mxu0 0.0
  %186 = vmatpush2.msra.mxu0 0.0
  %187 = vmatprep.subr.mxu0 0.0
  %188 = vmatpush2.msra.mxu0 0.0
  %189 = vmatprep.subr.mxu0 0.0
  %190 = vmatpush2.msra.mxu0 0.0
  %191 = vmatprep.subr.mxu0 0.0
  %192 = vmatpush2.msra.mxu0 0.0
  %193 = vmatprep.subr.mxu0 0.0
  %194 = vmatpush2.msra.mxu0 0.0
  %195 = vmatprep.subr.mxu0 0.0
  %196 = vmatpush2.msra.mxu0 0.0
  %197 = vmatprep.subr.mxu0 0.0
  %198 = vmatpush2.msra.mxu0 0.0
  %199 = vmatprep.mubr.f32.mxu0 0.0
  %200 = vmatmul.mubr.f32.gmra.mxu0 %v130
  %v201 = vpop.f32.mrf.mxu0
  %v202 = vadd.f32 0.0, %v201
  %v203 = vpop.f32.mrf.mxu0
  %204 = vdwg.mxu0
  %v206 = vsel %vm51, %v21, 0
  %v209 = vsel %vm55, %v37, 0
  %211 = vmatprep.subr.mxu0 0.0
  %212 = vmatpush1.msra.mxu0 0.0
  %213 = vmatprep.subr.mxu0 0.0
  %214 = vmatpush1.msra.mxu0 0.0
  %215 = vmatprep.subr.mxu0 0.0
  %216 = vmatpush1.msra.mxu0 0.0
  %217 = vmatprep.subr.mxu0 0.0
  %218 = vmatpush1.msra.mxu0 0.0
  %219 = vmatprep.subr.mxu0 0.0
  %220 = vmatpush1.msra.mxu0 0.0
  %221 = vmatprep.subr.mxu0 0.0
  %222 = vmatpush1.msra.mxu0 0.0
  %223 = vmatprep.subr.mxu0 0.0
  %224 = vmatpush1.msra.mxu0 0.0
  %225 = vmatprep.subr.mxu0 0.0
  %226 = vmatpush1.msra.mxu0 0.0
  %227 = vmatprep.subr.mxu0 0.0
  %228 = vmatpush1.msra.mxu0 0.0
  %229 = vmatprep.subr.mxu0 0.0
  %230 = vmatpush1.msra.mxu0 0.0
  %231 = vmatprep.subr.mxu0 0.0
  %232 = vmatpush1.msra.mxu0 0.0
  %233 = vmatprep.subr.mxu0 0.0
  %234 = vmatpush1.msra.mxu0 0.0
  %235 = vmatprep.subr.mxu0 0.0
  %236 = vmatpush1.msra.mxu0 0.0
  %237 = vmatprep.subr.mxu0 0.0
  %238 = vmatpush1.msra.mxu0 0.0
  %239 = vmatprep.subr.mxu0 0.0
  %240 = vmatpush1.msra.mxu0 0.0
  %241 = vmatprep.subr.mxu0 0.0
  %242 = vmatpush1.msra.mxu0 %v209
  %243 = vmatprep.subr.mxu0 0.0
  %244 = vmatpush2.msra.mxu0 0.0
  %245 = vmatprep.subr.mxu0 0.0
  %246 = vmatpush2.msra.mxu0 0.0
  %247 = vmatprep.subr.mxu0 0.0
  %248 = vmatpush2.msra.mxu0 0.0
  %249 = vmatprep.subr.mxu0 0.0
  %250 = vmatpush2.msra.mxu0 0.0
  %251 = vmatprep.subr.mxu0 0.0
  %252 = vmatpush2.msra.mxu0 0.0
  %253 = vmatprep.subr.mxu0 0.0
  %254 = vmatpush2.msra.mxu0 0.0
  %255 = vmatprep.subr.mxu0 0.0
  %256 = vmatpush2.msra.mxu0 0.0
  %257 = vmatprep.subr.mxu0 0.0
  %258 = vmatpush2.msra.mxu0 0.0
  %259 = vmatprep.subr.mxu0 0.0
  %260 = vmatpush2.msra.mxu0 0.0
  %261 = vmatprep.subr.mxu0 0.0
  %262 = vmatpush2.msra.mxu0 0.0
  %263 = vmatprep.subr.mxu0 0.0
  %264 = vmatpush2.msra.mxu0 0.0
  %265 = vmatprep.subr.mxu0 0.0
  %266 = vmatpush2.msra.mxu0 0.0
  %267 = vmatprep.subr.mxu0 0.0
  %268 = vmatpush2.msra.mxu0 0.0
  %269 = vmatprep.subr.mxu0 0.0
  %270 = vmatpush2.msra.mxu0 0.0
  %271 = vmatprep.subr.mxu0 0.0
  %272 = vmatpush2.msra.mxu0 0.0
  %273 = vmatprep.subr.mxu0 0.0
  %274 = vmatpush2.msra.mxu0 0.0
  %275 = vmatprep.mubr.f32.mxu0 0.0
  %276 = vmatmul.mubr.f32.gmra.mxu0 %v206
  %v277 = vpop.f32.mrf.mxu0
  %v278 = vadd.f32 0.0, %v277
  %v279 = vpop.f32.mrf.mxu0
  %280 = vdwg.mxu0
  %v282 = vsel %vm51, %v22, 0
  %v285 = vsel %vm55, %v38, 0
  %287 = vmatprep.subr.mxu0 0.0
  %288 = vmatpush1.msra.mxu0 0.0
  %289 = vmatprep.subr.mxu0 0.0
  %290 = vmatpush1.msra.mxu0 0.0
  %291 = vmatprep.subr.mxu0 0.0
  %292 = vmatpush1.msra.mxu0 0.0
  %293 = vmatprep.subr.mxu0 0.0
  %294 = vmatpush1.msra.mxu0 0.0
  %295 = vmatprep.subr.mxu0 0.0
  %296 = vmatpush1.msra.mxu0 0.0
  %297 = vmatprep.subr.mxu0 0.0
  %298 = vmatpush1.msra.mxu0 0.0
  %299 = vmatprep.subr.mxu0 0.0
  %300 = vmatpush1.msra.mxu0 0.0
  %301 = vmatprep.subr.mxu0 0.0
  %302 = vmatpush1.msra.mxu0 0.0
  %303 = vmatprep.subr.mxu0 0.0
  %304 = vmatpush1.msra.mxu0 0.0
  %305 = vmatprep.subr.mxu0 0.0
  %306 = vmatpush1.msra.mxu0 0.0
  %307 = vmatprep.subr.mxu0 0.0
  %308 = vmatpush1.msra.mxu0 0.0
  %309 = vmatprep.subr.mxu0 0.0
  %310 = vmatpush1.msra.mxu0 0.0
  %311 = vmatprep.subr.mxu0 0.0
  %312 = vmatpush1.msra.mxu0 0.0
  %313 = vmatprep.subr.mxu0 0.0
  %314 = vmatpush1.msra.mxu0 0.0
  %315 = vmatprep.subr.mxu0 0.0
  %316 = vmatpush1.msra.mxu0 0.0
  %317 = vmatprep.subr.mxu0 0.0
  %318 = vmatpush1.msra.mxu0 %v285
  %319 = vmatprep.subr.mxu0 0.0
  %320 = vmatpush2.msra.mxu0 0.0
  %321 = vmatprep.subr.mxu0 0.0
  %322 = vmatpush2.msra.mxu0 0.0
  %323 = vmatprep.subr.mxu0 0.0
  %324 = vmatpush2.msra.mxu0 0.0
  %325 = vmatprep.subr.mxu0 0.0
  %326 = vmatpush2.msra.mxu0 0.0
  %327 = vmatprep.subr.mxu0 0.0
  %328 = vmatpush2.msra.mxu0 0.0
  %329 = vmatprep.subr.mxu0 0.0
  %330 = vmatpush2.msra.mxu0 0.0
  %331 = vmatprep.subr.mxu0 0.0
  %332 = vmatpush2.msra.mxu0 0.0
  %333 = vmatprep.subr.mxu0 0.0
  %334 = vmatpush2.msra.mxu0 0.0
  %335 = vmatprep.subr.mxu0 0.0
  %336 = vmatpush2.msra.mxu0 0.0
  %337 = vmatprep.subr.mxu0 0.0
  %338 = vmatpush2.msra.mxu0 0.0
  %339 = vmatprep.subr.mxu0 0.0
  %340 = vmatpush2.msra.mxu0 0.0
  %341 = vmatprep.subr.mxu0 0.0
  %342 = vmatpush2.msra.mxu0 0.0
  %343 = vmatprep.subr.mxu0 0.0
  %344 = vmatpush2.msra.mxu0 0.0
  %345 = vmatprep.subr.mxu0 0.0
  %346 = vmatpush2.msra.mxu0 0.0
  %347 = vmatprep.subr.mxu0 0.0
  %348 = vmatpush2.msra.mxu0 0.0
  %349 = vmatprep.subr.mxu0 0.0
  %350 = vmatpush2.msra.mxu0 0.0
  %351 = vmatprep.mubr.f32.mxu0 0.0
  %352 = vmatmul.mubr.f32.gmra.mxu0 %v282
  %v353 = vpop.f32.mrf.mxu0
  %v354 = vadd.f32 0.0, %v353
  %v355 = vpop.f32.mrf.mxu0
  %356 = vdwg.mxu0
  %v358 = vsel %vm51, %v23, 0
  %v361 = vsel %vm55, %v39, 0
  %363 = vmatprep.subr.mxu0 0.0
  %364 = vmatpush1.msra.mxu0 0.0
  %365 = vmatprep.subr.mxu0 0.0
  %366 = vmatpush1.msra.mxu0 0.0
  %367 = vmatprep.subr.mxu0 0.0
  %368 = vmatpush1.msra.mxu0 0.0
  %369 = vmatprep.subr.mxu0 0.0
  %370 = vmatpush1.msra.mxu0 0.0
  %371 = vmatprep.subr.mxu0 0.0
  %372 = vmatpush1.msra.mxu0 0.0
  %373 = vmatprep.subr.mxu0 0.0
  %374 = vmatpush1.msra.mxu0 0.0
  %375 = vmatprep.subr.mxu0 0.0
  %376 = vmatpush1.msra.mxu0 0.0
  %377 = vmatprep.subr.mxu0 0.0
  %378 = vmatpush1.msra.mxu0 0.0
  %379 = vmatprep.subr.mxu0 0.0
  %380 = vmatpush1.msra.mxu0 0.0
  %381 = vmatprep.subr.mxu0 0.0
  %382 = vmatpush1.msra.mxu0 0.0
  %383 = vmatprep.subr.mxu0 0.0
  %384 = vmatpush1.msra.mxu0 0.0
  %385 = vmatprep.subr.mxu0 0.0
  %386 = vmatpush1.msra.mxu0 0.0
  %387 = vmatprep.subr.mxu0 0.0
  %388 = vmatpush1.msra.mxu0 0.0
  %389 = vmatprep.subr.mxu0 0.0
  %390 = vmatpush1.msra.mxu0 0.0
  %391 = vmatprep.subr.mxu0 0.0
  %392 = vmatpush1.msra.mxu0 0.0
  %393 = vmatprep.subr.mxu0 0.0
  %394 = vmatpush1.msra.mxu0 %v361
  %395 = vmatprep.subr.mxu0 0.0
  %396 = vmatpush2.msra.mxu0 0.0
  %397 = vmatprep.subr.mxu0 0.0
  %398 = vmatpush2.msra.mxu0 0.0
  %399 = vmatprep.subr.mxu0 0.0
  %400 = vmatpush2.msra.mxu0 0.0
  %401 = vmatprep.subr.mxu0 0.0
  %402 = vmatpush2.msra.mxu0 0.0
  %403 = vmatprep.subr.mxu0 0.0
  %404 = vmatpush2.msra.mxu0 0.0
  %405 = vmatprep.subr.mxu0 0.0
  %406 = vmatpush2.msra.mxu0 0.0
  %407 = vmatprep.subr.mxu0 0.0
  %408 = vmatpush2.msra.mxu0 0.0
  %409 = vmatprep.subr.mxu0 0.0
  %410 = vmatpush2.msra.mxu0 0.0
  %411 = vmatprep.subr.mxu0 0.0
  %412 = vmatpush2.msra.mxu0 0.0
  %413 = vmatprep.subr.mxu0 0.0
  %414 = vmatpush2.msra.mxu0 0.0
  %415 = vmatprep.subr.mxu0 0.0
  %416 = vmatpush2.msra.mxu0 0.0
  %417 = vmatprep.subr.mxu0 0.0
  %418 = vmatpush2.msra.mxu0 0.0
  %419 = vmatprep.subr.mxu0 0.0
  %420 = vmatpush2.msra.mxu0 0.0
  %421 = vmatprep.subr.mxu0 0.0
  %422 = vmatpush2.msra.mxu0 0.0
  %423 = vmatprep.subr.mxu0 0.0
  %424 = vmatpush2.msra.mxu0 0.0
  %425 = vmatprep.subr.mxu0 0.0
  %426 = vmatpush2.msra.mxu0 0.0
  %427 = vmatprep.mubr.f32.mxu0 0.0
  %428 = vmatmul.mubr.f32.gmra.mxu0 %v358
  %v429 = vpop.f32.mrf.mxu0
  %v430 = vadd.f32 0.0, %v429
  %v431 = vpop.f32.mrf.mxu0
  %432 = vdwg.mxu0
  %v434 = vsel %vm51, %v24, 0
  %v437 = vsel %vm55, %v40, 0
  %439 = vmatprep.subr.mxu0 0.0
  %440 = vmatpush1.msra.mxu0 0.0
  %441 = vmatprep.subr.mxu0 0.0
  %442 = vmatpush1.msra.mxu0 0.0
  %443 = vmatprep.subr.mxu0 0.0
  %444 = vmatpush1.msra.mxu0 0.0
  %445 = vmatprep.subr.mxu0 0.0
  %446 = vmatpush1.msra.mxu0 0.0
  %447 = vmatprep.subr.mxu0 0.0
  %448 = vmatpush1.msra.mxu0 0.0
  %449 = vmatprep.subr.mxu0 0.0
  %450 = vmatpush1.msra.mxu0 0.0
  %451 = vmatprep.subr.mxu0 0.0
  %452 = vmatpush1.msra.mxu0 0.0
  %453 = vmatprep.subr.mxu0 0.0
  %454 = vmatpush1.msra.mxu0 0.0
  %455 = vmatprep.subr.mxu0 0.0
  %456 = vmatpush1.msra.mxu0 0.0
  %457 = vmatprep.subr.mxu0 0.0
  %458 = vmatpush1.msra.mxu0 0.0
  %459 = vmatprep.subr.mxu0 0.0
  %460 = vmatpush1.msra.mxu0 0.0
  %461 = vmatprep.subr.mxu0 0.0
  %462 = vmatpush1.msra.mxu0 0.0
  %463 = vmatprep.subr.mxu0 0.0
  %464 = vmatpush1.msra.mxu0 0.0
  %465 = vmatprep.subr.mxu0 0.0
  %466 = vmatpush1.msra.mxu0 0.0
  %467 = vmatprep.subr.mxu0 0.0
  %468 = vmatpush1.msra.mxu0 0.0
  %469 = vmatprep.subr.mxu0 0.0
  %470 = vmatpush1.msra.mxu0 %v437
  %471 = vmatprep.subr.mxu0 0.0
  %472 = vmatpush2.msra.mxu0 0.0
  %473 = vmatprep.subr.mxu0 0.0
  %474 = vmatpush2.msra.mxu0 0.0
  %475 = vmatprep.subr.mxu0 0.0
  %476 = vmatpush2.msra.mxu0 0.0
  %477 = vmatprep.subr.mxu0 0.0
  %478 = vmatpush2.msra.mxu0 0.0
  %479 = vmatprep.subr.mxu0 0.0
  %480 = vmatpush2.msra.mxu0 0.0
  %481 = vmatprep.subr.mxu0 0.0
  %482 = vmatpush2.msra.mxu0 0.0
  %483 = vmatprep.subr.mxu0 0.0
  %484 = vmatpush2.msra.mxu0 0.0
  %485 = vmatprep.subr.mxu0 0.0
  %486 = vmatpush2.msra.mxu0 0.0
  %487 = vmatprep.subr.mxu0 0.0
  %488 = vmatpush2.msra.mxu0 0.0
  %489 = vmatprep.subr.mxu0 0.0
  %490 = vmatpush2.msra.mxu0 0.0
  %491 = vmatprep.subr.mxu0 0.0
  %492 = vmatpush2.msra.mxu0 0.0
  %493 = vmatprep.subr.mxu0 0.0
  %494 = vmatpush2.msra.mxu0 0.0
  %495 = vmatprep.subr.mxu0 0.0
  %496 = vmatpush2.msra.mxu0 0.0
  %497 = vmatprep.subr.mxu0 0.0
  %498 = vmatpush2.msra.mxu0 0.0
  %499 = vmatprep.subr.mxu0 0.0
  %500 = vmatpush2.msra.mxu0 0.0
  %501 = vmatprep.subr.mxu0 0.0
  %502 = vmatpush2.msra.mxu0 0.0
  %503 = vmatprep.mubr.f32.mxu0 0.0
  %504 = vmatmul.mubr.f32.gmra.mxu0 %v434
  %v505 = vpop.f32.mrf.mxu0
  %v506 = vadd.f32 0.0, %v505
  %v507 = vpop.f32.mrf.mxu0
  %508 = vdwg.mxu0
  %v510 = vsel %vm51, %v25, 0
  %v513 = vsel %vm55, %v41, 0
  %515 = vmatprep.subr.mxu0 0.0
  %516 = vmatpush1.msra.mxu0 0.0
  %517 = vmatprep.subr.mxu0 0.0
  %518 = vmatpush1.msra.mxu0 0.0
  %519 = vmatprep.subr.mxu0 0.0
  %520 = vmatpush1.msra.mxu0 0.0
  %521 = vmatprep.subr.mxu0 0.0
  %522 = vmatpush1.msra.mxu0 0.0
  %523 = vmatprep.subr.mxu0 0.0
  %524 = vmatpush1.msra.mxu0 0.0
  %525 = vmatprep.subr.mxu0 0.0
  %526 = vmatpush1.msra.mxu0 0.0
  %527 = vmatprep.subr.mxu0 0.0
  %528 = vmatpush1.msra.mxu0 0.0
  %529 = vmatprep.subr.mxu0 0.0
  %530 = vmatpush1.msra.mxu0 0.0
  %531 = vmatprep.subr.mxu0 0.0
  %532 = vmatpush1.msra.mxu0 0.0
  %533 = vmatprep.subr.mxu0 0.0
  %534 = vmatpush1.msra.mxu0 0.0
  %535 = vmatprep.subr.mxu0 0.0
  %536 = vmatpush1.msra.mxu0 0.0
  %537 = vmatprep.subr.mxu0 0.0
  %538 = vmatpush1.msra.mxu0 0.0
  %539 = vmatprep.subr.mxu0 0.0
  %540 = vmatpush1.msra.mxu0 0.0
  %541 = vmatprep.subr.mxu0 0.0
  %542 = vmatpush1.msra.mxu0 0.0
  %543 = vmatprep.subr.mxu0 0.0
  %544 = vmatpush1.msra.mxu0 0.0
  %545 = vmatprep.subr.mxu0 0.0
  %546 = vmatpush1.msra.mxu0 %v513
  %547 = vmatprep.subr.mxu0 0.0
  %548 = vmatpush2.msra.mxu0 0.0
  %549 = vmatprep.subr.mxu0 0.0
  %550 = vmatpush2.msra.mxu0 0.0
  %551 = vmatprep.subr.mxu0 0.0
  %552 = vmatpush2.msra.mxu0 0.0
  %553 = vmatprep.subr.mxu0 0.0
  %554 = vmatpush2.msra.mxu0 0.0
  %555 = vmatprep.subr.mxu0 0.0
  %556 = vmatpush2.msra.mxu0 0.0
  %557 = vmatprep.subr.mxu0 0.0
  %558 = vmatpush2.msra.mxu0 0.0
  %559 = vmatprep.subr.mxu0 0.0
  %560 = vmatpush2.msra.mxu0 0.0
  %561 = vmatprep.subr.mxu0 0.0
  %562 = vmatpush2.msra.mxu0 0.0
  %563 = vmatprep.subr.mxu0 0.0
  %564 = vmatpush2.msra.mxu0 0.0
  %565 = vmatprep.subr.mxu0 0.0
  %566 = vmatpush2.msra.mxu0 0.0
  %567 = vmatprep.subr.mxu0 0.0
  %568 = vmatpush2.msra.mxu0 0.0
  %569 = vmatprep.subr.mxu0 0.0
  %570 = vmatpush2.msra.mxu0 0.0
  %571 = vmatprep.subr.mxu0 0.0
  %572 = vmatpush2.msra.mxu0 0.0
  %573 = vmatprep.subr.mxu0 0.0
  %574 = vmatpush2.msra.mxu0 0.0
  %575 = vmatprep.subr.mxu0 0.0
  %576 = vmatpush2.msra.mxu0 0.0
  %577 = vmatprep.subr.mxu0 0.0
  %578 = vmatpush2.msra.mxu0 0.0
  %579 = vmatprep.mubr.f32.mxu0 0.0
  %580 = vmatmul.mubr.f32.gmra.mxu0 %v510
  %v581 = vpop.f32.mrf.mxu0
  %v582 = vadd.f32 0.0, %v581
  %v583 = vpop.f32.mrf.mxu0
  %584 = vdwg.mxu0
  %v586 = vsel %vm51, %v26, 0
  %v589 = vsel %vm55, %v42, 0
  %591 = vmatprep.subr.mxu0 0.0
  %592 = vmatpush1.msra.mxu0 0.0
  %593 = vmatprep.subr.mxu0 0.0
  %594 = vmatpush1.msra.mxu0 0.0
  %595 = vmatprep.subr.mxu0 0.0
  %596 = vmatpush1.msra.mxu0 0.0
  %597 = vmatprep.subr.mxu0 0.0
  %598 = vmatpush1.msra.mxu0 0.0
  %599 = vmatprep.subr.mxu0 0.0
  %600 = vmatpush1.msra.mxu0 0.0
  %601 = vmatprep.subr.mxu0 0.0
  %602 = vmatpush1.msra.mxu0 0.0
  %603 = vmatprep.subr.mxu0 0.0
  %604 = vmatpush1.msra.mxu0 0.0
  %605 = vmatprep.subr.mxu0 0.0
  %606 = vmatpush1.msra.mxu0 0.0
  %607 = vmatprep.subr.mxu0 0.0
  %608 = vmatpush1.msra.mxu0 0.0
  %609 = vmatprep.subr.mxu0 0.0
  %610 = vmatpush1.msra.mxu0 0.0
  %611 = vmatprep.subr.mxu0 0.0
  %612 = vmatpush1.msra.mxu0 0.0
  %613 = vmatprep.subr.mxu0 0.0
  %614 = vmatpush1.msra.mxu0 0.0
  %615 = vmatprep.subr.mxu0 0.0
  %616 = vmatpush1.msra.mxu0 0.0
  %617 = vmatprep.subr.mxu0 0.0
  %618 = vmatpush1.msra.mxu0 0.0
  %619 = vmatprep.subr.mxu0 0.0
  %620 = vmatpush1.msra.mxu0 0.0
  %621 = vmatprep.subr.mxu0 0.0
  %622 = vmatpush1.msra.mxu0 %v589
  %623 = vmatprep.subr.mxu0 0.0
  %624 = vmatpush2.msra.mxu0 0.0
  %625 = vmatprep.subr.mxu0 0.0
  %626 = vmatpush2.msra.mxu0 0.0
  %627 = vmatprep.subr.mxu0 0.0
  %628 = vmatpush2.msra.mxu0 0.0
  %629 = vmatprep.subr.mxu0 0.0
  %630 = vmatpush2.msra.mxu0 0.0
  %631 = vmatprep.subr.mxu0 0.0
  %632 = vmatpush2.msra.mxu0 0.0
  %633 = vmatprep.subr.mxu0 0.0
  %634 = vmatpush2.msra.mxu0 0.0
  %635 = vmatprep.subr.mxu0 0.0
  %636 = vmatpush2.msra.mxu0 0.0
  %637 = vmatprep.subr.mxu0 0.0
  %638 = vmatpush2.msra.mxu0 0.0
  %639 = vmatprep.subr.mxu0 0.0
  %640 = vmatpush2.msra.mxu0 0.0
  %641 = vmatprep.subr.mxu0 0.0
  %642 = vmatpush2.msra.mxu0 0.0
  %643 = vmatprep.subr.mxu0 0.0
  %644 = vmatpush2.msra.mxu0 0.0
  %645 = vmatprep.subr.mxu0 0.0
  %646 = vmatpush2.msra.mxu0 0.0
  %647 = vmatprep.subr.mxu0 0.0
  %648 = vmatpush2.msra.mxu0 0.0
  %649 = vmatprep.subr.mxu0 0.0
  %650 = vmatpush2.msra.mxu0 0.0
  %651 = vmatprep.subr.mxu0 0.0
  %652 = vmatpush2.msra.mxu0 0.0
  %653 = vmatprep.subr.mxu0 0.0
  %654 = vmatpush2.msra.mxu0 0.0
  %655 = vmatprep.mubr.f32.mxu0 0.0
  %656 = vmatmul.mubr.f32.gmra.mxu0 %v586
  %v657 = vpop.f32.mrf.mxu0
  %v658 = vadd.f32 0.0, %v657
  %v659 = vpop.f32.mrf.mxu0
  %660 = vdwg.mxu0
  %v662 = vsel %vm51, %v27, 0
  %v665 = vsel %vm55, %v43, 0
  %667 = vmatprep.subr.mxu0 0.0
  %668 = vmatpush1.msra.mxu0 0.0
  %669 = vmatprep.subr.mxu0 0.0
  %670 = vmatpush1.msra.mxu0 0.0
  %671 = vmatprep.subr.mxu0 0.0
  %672 = vmatpush1.msra.mxu0 0.0
  %673 = vmatprep.subr.mxu0 0.0
  %674 = vmatpush1.msra.mxu0 0.0
  %675 = vmatprep.subr.mxu0 0.0
  %676 = vmatpush1.msra.mxu0 0.0
  %677 = vmatprep.subr.mxu0 0.0
  %678 = vmatpush1.msra.mxu0 0.0
  %679 = vmatprep.subr.mxu0 0.0
  %680 = vmatpush1.msra.mxu0 0.0
  %681 = vmatprep.subr.mxu0 0.0
  %682 = vmatpush1.msra.mxu0 0.0
  %683 = vmatprep.subr.mxu0 0.0
  %684 = vmatpush1.msra.mxu0 0.0
  %685 = vmatprep.subr.mxu0 0.0
  %686 = vmatpush1.msra.mxu0 0.0
  %687 = vmatprep.subr.mxu0 0.0
  %688 = vmatpush1.msra.mxu0 0.0
  %689 = vmatprep.subr.mxu0 0.0
  %690 = vmatpush1.msra.mxu0 0.0
  %691 = vmatprep.subr.mxu0 0.0
  %692 = vmatpush1.msra.mxu0 0.0
  %693 = vmatprep.subr.mxu0 0.0
  %694 = vmatpush1.msra.mxu0 0.0
  %695 = vmatprep.subr.mxu0 0.0
  %696 = vmatpush1.msra.mxu0 0.0
  %697 = vmatprep.subr.mxu0 0.0
  %698 = vmatpush1.msra.mxu0 %v665
  %699 = vmatprep.subr.mxu0 0.0
  %700 = vmatpush2.msra.mxu0 0.0
  %701 = vmatprep.subr.mxu0 0.0
  %702 = vmatpush2.msra.mxu0 0.0
  %703 = vmatprep.subr.mxu0 0.0
  %704 = vmatpush2.msra.mxu0 0.0
  %705 = vmatprep.subr.mxu0 0.0
  %706 = vmatpush2.msra.mxu0 0.0
  %707 = vmatprep.subr.mxu0 0.0
  %708 = vmatpush2.msra.mxu0 0.0
  %709 = vmatprep.subr.mxu0 0.0
  %710 = vmatpush2.msra.mxu0 0.0
  %711 = vmatprep.subr.mxu0 0.0
  %712 = vmatpush2.msra.mxu0 0.0
  %713 = vmatprep.subr.mxu0 0.0
  %714 = vmatpush2.msra.mxu0 0.0
  %715 = vmatprep.subr.mxu0 0.0
  %716 = vmatpush2.msra.mxu0 0.0
  %717 = vmatprep.subr.mxu0 0.0
  %718 = vmatpush2.msra.mxu0 0.0
  %719 = vmatprep.subr.mxu0 0.0
  %720 = vmatpush2.msra.mxu0 0.0
  %721 = vmatprep.subr.mxu0 0.0
  %722 = vmatpush2.msra.mxu0 0.0
  %723 = vmatprep.subr.mxu0 0.0
  %724 = vmatpush2.msra.mxu0 0.0
  %725 = vmatprep.subr.mxu0 0.0
  %726 = vmatpush2.msra.mxu0 0.0
  %727 = vmatprep.subr.mxu0 0.0
  %728 = vmatpush2.msra.mxu0 0.0
  %729 = vmatprep.subr.mxu0 0.0
  %730 = vmatpush2.msra.mxu0 0.0
  %731 = vmatprep.mubr.f32.mxu0 0.0
  %732 = vmatmul.mubr.f32.gmra.mxu0 %v662
  %v733 = vpop.f32.mrf.mxu0
  %v734 = vadd.f32 0.0, %v733
  %v735 = vpop.f32.mrf.mxu0
  %736 = vdwg.mxu0
  %v738 = vsel %vm51, %v28, 0
  %v741 = vsel %vm55, %v44, 0
  %743 = vmatprep.subr.mxu0 0.0
  %744 = vmatpush1.msra.mxu0 0.0
  %745 = vmatprep.subr.mxu0 0.0
  %746 = vmatpush1.msra.mxu0 0.0
  %747 = vmatprep.subr.mxu0 0.0
  %748 = vmatpush1.msra.mxu0 0.0
  %749 = vmatprep.subr.mxu0 0.0
  %750 = vmatpush1.msra.mxu0 0.0
  %751 = vmatprep.subr.mxu0 0.0
  %752 = vmatpush1.msra.mxu0 0.0
  %753 = vmatprep.subr.mxu0 0.0
  %754 = vmatpush1.msra.mxu0 0.0
  %755 = vmatprep.subr.mxu0 0.0
  %756 = vmatpush1.msra.mxu0 0.0
  %757 = vmatprep.subr.mxu0 0.0
  %758 = vmatpush1.msra.mxu0 0.0
  %759 = vmatprep.subr.mxu0 0.0
  %760 = vmatpush1.msra.mxu0 0.0
  %761 = vmatprep.subr.mxu0 0.0
  %762 = vmatpush1.msra.mxu0 0.0
  %763 = vmatprep.subr.mxu0 0.0
  %764 = vmatpush1.msra.mxu0 0.0
  %765 = vmatprep.subr.mxu0 0.0
  %766 = vmatpush1.msra.mxu0 0.0
  %767 = vmatprep.subr.mxu0 0.0
  %768 = vmatpush1.msra.mxu0 0.0
  %769 = vmatprep.subr.mxu0 0.0
  %770 = vmatpush1.msra.mxu0 0.0
  %771 = vmatprep.subr.mxu0 0.0
  %772 = vmatpush1.msra.mxu0 0.0
  %773 = vmatprep.subr.mxu0 0.0
  %774 = vmatpush1.msra.mxu0 %v741
  %775 = vmatprep.subr.mxu0 0.0
  %776 = vmatpush2.msra.mxu0 0.0
  %777 = vmatprep.subr.mxu0 0.0
  %778 = vmatpush2.msra.mxu0 0.0
  %779 = vmatprep.subr.mxu0 0.0
  %780 = vmatpush2.msra.mxu0 0.0
  %781 = vmatprep.subr.mxu0 0.0
  %782 = vmatpush2.msra.mxu0 0.0
  %783 = vmatprep.subr.mxu0 0.0
  %784 = vmatpush2.msra.mxu0 0.0
  %785 = vmatprep.subr.mxu0 0.0
  %786 = vmatpush2.msra.mxu0 0.0
  %787 = vmatprep.subr.mxu0 0.0
  %788 = vmatpush2.msra.mxu0 0.0
  %789 = vmatprep.subr.mxu0 0.0
  %790 = vmatpush2.msra.mxu0 0.0
  %791 = vmatprep.subr.mxu0 0.0
  %792 = vmatpush2.msra.mxu0 0.0
  %793 = vmatprep.subr.mxu0 0.0
  %794 = vmatpush2.msra.mxu0 0.0
  %795 = vmatprep.subr.mxu0 0.0
  %796 = vmatpush2.msra.mxu0 0.0
  %797 = vmatprep.subr.mxu0 0.0
  %798 = vmatpush2.msra.mxu0 0.0
  %799 = vmatprep.subr.mxu0 0.0
  %800 = vmatpush2.msra.mxu0 0.0
  %801 = vmatprep.subr.mxu0 0.0
  %802 = vmatpush2.msra.mxu0 0.0
  %803 = vmatprep.subr.mxu0 0.0
  %804 = vmatpush2.msra.mxu0 0.0
  %805 = vmatprep.subr.mxu0 0.0
  %806 = vmatpush2.msra.mxu0 0.0
  %807 = vmatprep.mubr.f32.mxu0 0.0
  %808 = vmatmul.mubr.f32.gmra.mxu0 %v738
  %v809 = vpop.f32.mrf.mxu0
  %v810 = vadd.f32 0.0, %v809
  %v811 = vpop.f32.mrf.mxu0
  %812 = vdwg.mxu0
  %v814 = vsel %vm51, %v29, 0
  %v817 = vsel %vm55, %v45, 0
  %819 = vmatprep.subr.mxu0 0.0
  %820 = vmatpush1.msra.mxu0 0.0
  %821 = vmatprep.subr.mxu0 0.0
  %822 = vmatpush1.msra.mxu0 0.0
  %823 = vmatprep.subr.mxu0 0.0
  %824 = vmatpush1.msra.mxu0 0.0
  %825 = vmatprep.subr.mxu0 0.0
  %826 = vmatpush1.msra.mxu0 0.0
  %827 = vmatprep.subr.mxu0 0.0
  %828 = vmatpush1.msra.mxu0 0.0
  %829 = vmatprep.subr.mxu0 0.0
  %830 = vmatpush1.msra.mxu0 0.0
  %831 = vmatprep.subr.mxu0 0.0
  %832 = vmatpush1.msra.mxu0 0.0
  %833 = vmatprep.subr.mxu0 0.0
  %834 = vmatpush1.msra.mxu0 0.0
  %835 = vmatprep.subr.mxu0 0.0
  %836 = vmatpush1.msra.mxu0 0.0
  %837 = vmatprep.subr.mxu0 0.0
  %838 = vmatpush1.msra.mxu0 0.0
  %839 = vmatprep.subr.mxu0 0.0
  %840 = vmatpush1.msra.mxu0 0.0
  %841 = vmatprep.subr.mxu0 0.0
  %842 = vmatpush1.msra.mxu0 0.0
  %843 = vmatprep.subr.mxu0 0.0
  %844 = vmatpush1.msra.mxu0 0.0
  %845 = vmatprep.subr.mxu0 0.0
  %846 = vmatpush1.msra.mxu0 0.0
  %847 = vmatprep.subr.mxu0 0.0
  %848 = vmatpush1.msra.mxu0 0.0
  %849 = vmatprep.subr.mxu0 0.0
  %850 = vmatpush1.msra.mxu0 %v817
  %851 = vmatprep.subr.mxu0 0.0
  %852 = vmatpush2.msra.mxu0 0.0
  %853 = vmatprep.subr.mxu0 0.0
  %854 = vmatpush2.msra.mxu0 0.0
  %855 = vmatprep.subr.mxu0 0.0
  %856 = vmatpush2.msra.mxu0 0.0
  %857 = vmatprep.subr.mxu0 0.0
  %858 = vmatpush2.msra.mxu0 0.0
  %859 = vmatprep.subr.mxu0 0.0
  %860 = vmatpush2.msra.mxu0 0.0
  %861 = vmatprep.subr.mxu0 0.0
  %862 = vmatpush2.msra.mxu0 0.0
  %863 = vmatprep.subr.mxu0 0.0
  %864 = vmatpush2.msra.mxu0 0.0
  %865 = vmatprep.subr.mxu0 0.0
  %866 = vmatpush2.msra.mxu0 0.0
  %867 = vmatprep.subr.mxu0 0.0
  %868 = vmatpush2.msra.mxu0 0.0
  %869 = vmatprep.subr.mxu0 0.0
  %870 = vmatpush2.msra.mxu0 0.0
  %871 = vmatprep.subr.mxu0 0.0
  %872 = vmatpush2.msra.mxu0 0.0
  %873 = vmatprep.subr.mxu0 0.0
  %874 = vmatpush2.msra.mxu0 0.0
  %875 = vmatprep.subr.mxu0 0.0
  %876 = vmatpush2.msra.mxu0 0.0
  %877 = vmatprep.subr.mxu0 0.0
  %878 = vmatpush2.msra.mxu0 0.0
  %879 = vmatprep.subr.mxu0 0.0
  %880 = vmatpush2.msra.mxu0 0.0
  %881 = vmatprep.subr.mxu0 0.0
  %882 = vmatpush2.msra.mxu0 0.0
  %883 = vmatprep.mubr.f32.mxu0 0.0
  %884 = vmatmul.mubr.f32.gmra.mxu0 %v814
  %v885 = vpop.f32.mrf.mxu0
  %v886 = vadd.f32 0.0, %v885
  %v887 = vpop.f32.mrf.mxu0
  %888 = vdwg.mxu0
  %v890 = vsel %vm51, %v30, 0
  %v893 = vsel %vm55, %v46, 0
  %895 = vmatprep.subr.mxu0 0.0
  %896 = vmatpush1.msra.mxu0 0.0
  %897 = vmatprep.subr.mxu0 0.0
  %898 = vmatpush1.msra.mxu0 0.0
  %899 = vmatprep.subr.mxu0 0.0
  %900 = vmatpush1.msra.mxu0 0.0
  %901 = vmatprep.subr.mxu0 0.0
  %902 = vmatpush1.msra.mxu0 0.0
  %903 = vmatprep.subr.mxu0 0.0
  %904 = vmatpush1.msra.mxu0 0.0
  %905 = vmatprep.subr.mxu0 0.0
  %906 = vmatpush1.msra.mxu0 0.0
  %907 = vmatprep.subr.mxu0 0.0
  %908 = vmatpush1.msra.mxu0 0.0
  %909 = vmatprep.subr.mxu0 0.0
  %910 = vmatpush1.msra.mxu0 0.0
  %911 = vmatprep.subr.mxu0 0.0
  %912 = vmatpush1.msra.mxu0 0.0
  %913 = vmatprep.subr.mxu0 0.0
  %914 = vmatpush1.msra.mxu0 0.0
  %915 = vmatprep.subr.mxu0 0.0
  %916 = vmatpush1.msra.mxu0 0.0
  %917 = vmatprep.subr.mxu0 0.0
  %918 = vmatpush1.msra.mxu0 0.0
  %919 = vmatprep.subr.mxu0 0.0
  %920 = vmatpush1.msra.mxu0 0.0
  %921 = vmatprep.subr.mxu0 0.0
  %922 = vmatpush1.msra.mxu0 0.0
  %923 = vmatprep.subr.mxu0 0.0
  %924 = vmatpush1.msra.mxu0 0.0
  %925 = vmatprep.subr.mxu0 0.0
  %926 = vmatpush1.msra.mxu0 %v893
  %927 = vmatprep.subr.mxu0 0.0
  %928 = vmatpush2.msra.mxu0 0.0
  %929 = vmatprep.subr.mxu0 0.0
  %930 = vmatpush2.msra.mxu0 0.0
  %931 = vmatprep.subr.mxu0 0.0
  %932 = vmatpush2.msra.mxu0 0.0
  %933 = vmatprep.subr.mxu0 0.0
  %934 = vmatpush2.msra.mxu0 0.0
  %935 = vmatprep.subr.mxu0 0.0
  %936 = vmatpush2.msra.mxu0 0.0
  %937 = vmatprep.subr.mxu0 0.0
  %938 = vmatpush2.msra.mxu0 0.0
  %939 = vmatprep.subr.mxu0 0.0
  %940 = vmatpush2.msra.mxu0 0.0
  %941 = vmatprep.subr.mxu0 0.0
  %942 = vmatpush2.msra.mxu0 0.0
  %943 = vmatprep.subr.mxu0 0.0
  %944 = vmatpush2.msra.mxu0 0.0
  %945 = vmatprep.subr.mxu0 0.0
  %946 = vmatpush2.msra.mxu0 0.0
  %947 = vmatprep.subr.mxu0 0.0
  %948 = vmatpush2.msra.mxu0 0.0
  %949 = vmatprep.subr.mxu0 0.0
  %950 = vmatpush2.msra.mxu0 0.0
  %951 = vmatprep.subr.mxu0 0.0
  %952 = vmatpush2.msra.mxu0 0.0
  %953 = vmatprep.subr.mxu0 0.0
  %954 = vmatpush2.msra.mxu0 0.0
  %955 = vmatprep.subr.mxu0 0.0
  %956 = vmatpush2.msra.mxu0 0.0
  %957 = vmatprep.subr.mxu0 0.0
  %958 = vmatpush2.msra.mxu0 0.0
  %959 = vmatprep.mubr.f32.mxu0 0.0
  %960 = vmatmul.mubr.f32.gmra.mxu0 %v890
  %v961 = vpop.f32.mrf.mxu0
  %v962 = vadd.f32 0.0, %v961
  %v963 = vpop.f32.mrf.mxu0
  %964 = vdwg.mxu0
  %v966 = vsel %vm51, %v31, 0
  %v969 = vsel %vm55, %v47, 0
  %971 = vmatprep.subr.mxu0 0.0
  %972 = vmatpush1.msra.mxu0 0.0
  %973 = vmatprep.subr.mxu0 0.0
  %974 = vmatpush1.msra.mxu0 0.0
  %975 = vmatprep.subr.mxu0 0.0
  %976 = vmatpush1.msra.mxu0 0.0
  %977 = vmatprep.subr.mxu0 0.0
  %978 = vmatpush1.msra.mxu0 0.0
  %979 = vmatprep.subr.mxu0 0.0
  %980 = vmatpush1.msra.mxu0 0.0
  %981 = vmatprep.subr.mxu0 0.0
  %982 = vmatpush1.msra.mxu0 0.0
  %983 = vmatprep.subr.mxu0 0.0
  %984 = vmatpush1.msra.mxu0 0.0
  %985 = vmatprep.subr.mxu0 0.0
  %986 = vmatpush1.msra.mxu0 0.0
  %987 = vmatprep.subr.mxu0 0.0
  %988 = vmatpush1.msra.mxu0 0.0
  %989 = vmatprep.subr.mxu0 0.0
  %990 = vmatpush1.msra.mxu0 0.0
  %991 = vmatprep.subr.mxu0 0.0
  %992 = vmatpush1.msra.mxu0 0.0
  %993 = vmatprep.subr.mxu0 0.0
  %994 = vmatpush1.msra.mxu0 0.0
  %995 = vmatprep.subr.mxu0 0.0
  %996 = vmatpush1.msra.mxu0 0.0
  %997 = vmatprep.subr.mxu0 0.0
  %998 = vmatpush1.msra.mxu0 0.0
  %999 = vmatprep.subr.mxu0 0.0
  %1000 = vmatpush1.msra.mxu0 0.0
  %1001 = vmatprep.subr.mxu0 0.0
  %1002 = vmatpush1.msra.mxu0 %v969
  %1003 = vmatprep.subr.mxu0 0.0
  %1004 = vmatpush2.msra.mxu0 0.0
  %1005 = vmatprep.subr.mxu0 0.0
  %1006 = vmatpush2.msra.mxu0 0.0
  %1007 = vmatprep.subr.mxu0 0.0
  %1008 = vmatpush2.msra.mxu0 0.0
  %1009 = vmatprep.subr.mxu0 0.0
  %1010 = vmatpush2.msra.mxu0 0.0
  %1011 = vmatprep.subr.mxu0 0.0
  %1012 = vmatpush2.msra.mxu0 0.0
  %1013 = vmatprep.subr.mxu0 0.0
  %1014 = vmatpush2.msra.mxu0 0.0
  %1015 = vmatprep.subr.mxu0 0.0
  %1016 = vmatpush2.msra.mxu0 0.0
  %1017 = vmatprep.subr.mxu0 0.0
  %1018 = vmatpush2.msra.mxu0 0.0
  %1019 = vmatprep.subr.mxu0 0.0
  %1020 = vmatpush2.msra.mxu0 0.0
  %1021 = vmatprep.subr.mxu0 0.0
  %1022 = vmatpush2.msra.mxu0 0.0
  %1023 = vmatprep.subr.mxu0 0.0
  %1024 = vmatpush2.msra.mxu0 0.0
  %1025 = vmatprep.subr.mxu0 0.0
  %1026 = vmatpush2.msra.mxu0 0.0
  %1027 = vmatprep.subr.mxu0 0.0
  %1028 = vmatpush2.msra.mxu0 0.0
  %1029 = vmatprep.subr.mxu0 0.0
  %1030 = vmatpush2.msra.mxu0 0.0
  %1031 = vmatprep.subr.mxu0 0.0
  %1032 = vmatpush2.msra.mxu0 0.0
  %1033 = vmatprep.subr.mxu0 0.0
  %1034 = vmatpush2.msra.mxu0 0.0
  %1035 = vmatprep.mubr.f32.mxu0 0.0
  %1036 = vmatmul.mubr.f32.gmra.mxu0 %v966
  %v1037 = vpop.f32.mrf.mxu0
  %v1038 = vadd.f32 0.0, %v1037
  %v1039 = vpop.f32.mrf.mxu0
  %1040 = vdwg.mxu0
  %v1042 = vsel %vm51, %v32, 0
  %v1045 = vsel %vm55, %v48, 0
  %1047 = vmatprep.subr.mxu0 0.0
  %1048 = vmatpush1.msra.mxu0 0.0
  %1049 = vmatprep.subr.mxu0 0.0
  %1050 = vmatpush1.msra.mxu0 0.0
  %1051 = vmatprep.subr.mxu0 0.0
  %1052 = vmatpush1.msra.mxu0 0.0
  %1053 = vmatprep.subr.mxu0 0.0
  %1054 = vmatpush1.msra.mxu0 0.0
  %1055 = vmatprep.subr.mxu0 0.0
  %1056 = vmatpush1.msra.mxu0 0.0
  %1057 = vmatprep.subr.mxu0 0.0
  %1058 = vmatpush1.msra.mxu0 0.0
  %1059 = vmatprep.subr.mxu0 0.0
  %1060 = vmatpush1.msra.mxu0 0.0
  %1061 = vmatprep.subr.mxu0 0.0
  %1062 = vmatpush1.msra.mxu0 0.0
  %1063 = vmatprep.subr.mxu0 0.0
  %1064 = vmatpush1.msra.mxu0 0.0
  %1065 = vmatprep.subr.mxu0 0.0
  %1066 = vmatpush1.msra.mxu0 0.0
  %1067 = vmatprep.subr.mxu0 0.0
  %1068 = vmatpush1.msra.mxu0 0.0
  %1069 = vmatprep.subr.mxu0 0.0
  %1070 = vmatpush1.msra.mxu0 0.0
  %1071 = vmatprep.subr.mxu0 0.0
  %1072 = vmatpush1.msra.mxu0 0.0
  %1073 = vmatprep.subr.mxu0 0.0
  %1074 = vmatpush1.msra.mxu0 0.0
  %1075 = vmatprep.subr.mxu0 0.0
  %1076 = vmatpush1.msra.mxu0 0.0
  %1077 = vmatprep.subr.mxu0 0.0
  %1078 = vmatpush1.msra.mxu0 %v1045
  %1079 = vmatprep.subr.mxu0 0.0
  %1080 = vmatpush2.msra.mxu0 0.0
  %1081 = vmatprep.subr.mxu0 0.0
  %1082 = vmatpush2.msra.mxu0 0.0
  %1083 = vmatprep.subr.mxu0 0.0
  %1084 = vmatpush2.msra.mxu0 0.0
  %1085 = vmatprep.subr.mxu0 0.0
  %1086 = vmatpush2.msra.mxu0 0.0
  %1087 = vmatprep.subr.mxu0 0.0
  %1088 = vmatpush2.msra.mxu0 0.0
  %1089 = vmatprep.subr.mxu0 0.0
  %1090 = vmatpush2.msra.mxu0 0.0
  %1091 = vmatprep.subr.mxu0 0.0
  %1092 = vmatpush2.msra.mxu0 0.0
  %1093 = vmatprep.subr.mxu0 0.0
  %1094 = vmatpush2.msra.mxu0 0.0
  %1095 = vmatprep.subr.mxu0 0.0
  %1096 = vmatpush2.msra.mxu0 0.0
  %1097 = vmatprep.subr.mxu0 0.0
  %1098 = vmatpush2.msra.mxu0 0.0
  %1099 = vmatprep.subr.mxu0 0.0
  %1100 = vmatpush2.msra.mxu0 0.0
  %1101 = vmatprep.subr.mxu0 0.0
  %1102 = vmatpush2.msra.mxu0 0.0
  %1103 = vmatprep.subr.mxu0 0.0
  %1104 = vmatpush2.msra.mxu0 0.0
  %1105 = vmatprep.subr.mxu0 0.0
  %1106 = vmatpush2.msra.mxu0 0.0
  %1107 = vmatprep.subr.mxu0 0.0
  %1108 = vmatpush2.msra.mxu0 0.0
  %1109 = vmatprep.subr.mxu0 0.0
  %1110 = vmatpush2.msra.mxu0 0.0
  %1111 = vmatprep.mubr.f32.mxu0 0.0
  %1112 = vmatmul.mubr.f32.gmra.mxu0 %v1042
  %v1113 = vpop.f32.mrf.mxu0
  %v1114 = vadd.f32 0.0, %v1113
  %v1115 = vpop.f32.mrf.mxu0
  %1116 = vdwg.mxu0
  %v1118 = vsel %vm51, %v33, 0
  %v1121 = vsel %vm55, %v49, 0
  %1123 = vmatprep.subr.mxu0 0.0
  %1124 = vmatpush1.msra.mxu0 0.0
  %1125 = vmatprep.subr.mxu0 0.0
  %1126 = vmatpush1.msra.mxu0 0.0
  %1127 = vmatprep.subr.mxu0 0.0
  %1128 = vmatpush1.msra.mxu0 0.0
  %1129 = vmatprep.subr.mxu0 0.0
  %1130 = vmatpush1.msra.mxu0 0.0
  %1131 = vmatprep.subr.mxu0 0.0
  %1132 = vmatpush1.msra.mxu0 0.0
  %1133 = vmatprep.subr.mxu0 0.0
  %1134 = vmatpush1.msra.mxu0 0.0
  %1135 = vmatprep.subr.mxu0 0.0
  %1136 = vmatpush1.msra.mxu0 0.0
  %1137 = vmatprep.subr.mxu0 0.0
  %1138 = vmatpush1.msra.mxu0 0.0
  %1139 = vmatprep.subr.mxu0 0.0
  %1140 = vmatpush1.msra.mxu0 0.0
  %1141 = vmatprep.subr.mxu0 0.0
  %1142 = vmatpush1.msra.mxu0 0.0
  %1143 = vmatprep.subr.mxu0 0.0
  %1144 = vmatpush1.msra.mxu0 0.0
  %1145 = vmatprep.subr.mxu0 0.0
  %1146 = vmatpush1.msra.mxu0 0.0
  %1147 = vmatprep.subr.mxu0 0.0
  %1148 = vmatpush1.msra.mxu0 0.0
  %1149 = vmatprep.subr.mxu0 0.0
  %1150 = vmatpush1.msra.mxu0 0.0
  %1151 = vmatprep.subr.mxu0 0.0
  %1152 = vmatpush1.msra.mxu0 0.0
  %1153 = vmatprep.subr.mxu0 0.0
  %1154 = vmatpush1.msra.mxu0 %v1121
  %1155 = vmatprep.subr.mxu0 0.0
  %1156 = vmatpush2.msra.mxu0 0.0
  %1157 = vmatprep.subr.mxu0 0.0
  %1158 = vmatpush2.msra.mxu0 0.0
  %1159 = vmatprep.subr.mxu0 0.0
  %1160 = vmatpush2.msra.mxu0 0.0
  %1161 = vmatprep.subr.mxu0 0.0
  %1162 = vmatpush2.msra.mxu0 0.0
  %1163 = vmatprep.subr.mxu0 0.0
  %1164 = vmatpush2.msra.mxu0 0.0
  %1165 = vmatprep.subr.mxu0 0.0
  %1166 = vmatpush2.msra.mxu0 0.0
  %1167 = vmatprep.subr.mxu0 0.0
  %1168 = vmatpush2.msra.mxu0 0.0
  %1169 = vmatprep.subr.mxu0 0.0
  %1170 = vmatpush2.msra.mxu0 0.0
  %1171 = vmatprep.subr.mxu0 0.0
  %1172 = vmatpush2.msra.mxu0 0.0
  %1173 = vmatprep.subr.mxu0 0.0
  %1174 = vmatpush2.msra.mxu0 0.0
  %1175 = vmatprep.subr.mxu0 0.0
  %1176 = vmatpush2.msra.mxu0 0.0
  %1177 = vmatprep.subr.mxu0 0.0
  %1178 = vmatpush2.msra.mxu0 0.0
  %1179 = vmatprep.subr.mxu0 0.0
  %1180 = vmatpush2.msra.mxu0 0.0
  %1181 = vmatprep.subr.mxu0 0.0
  %1182 = vmatpush2.msra.mxu0 0.0
  %1183 = vmatprep.subr.mxu0 0.0
  %1184 = vmatpush2.msra.mxu0 0.0
  %1185 = vmatprep.subr.mxu0 0.0
  %1186 = vmatpush2.msra.mxu0 0.0
  %1187 = vmatprep.mubr.f32.mxu0 0.0
  %1188 = vmatmul.mubr.f32.gmra.mxu0 %v1118
  %v1189 = vpop.f32.mrf.mxu0
  %v1190 = vadd.f32 0.0, %v1189
  %v1191 = vpop.f32.mrf.mxu0
  %1192 = vdwg.mxu0
  %v1194 = vsel %vm51, %v34, 0
  %v1197 = vsel %vm55, %v50, 0
  %1199 = vmatprep.subr.mxu0 0.0
  %1200 = vmatpush1.msra.mxu0 0.0
  %1201 = vmatprep.subr.mxu0 0.0
  %1202 = vmatpush1.msra.mxu0 0.0
  %1203 = vmatprep.subr.mxu0 0.0
  %1204 = vmatpush1.msra.mxu0 0.0
  %1205 = vmatprep.subr.mxu0 0.0
  %1206 = vmatpush1.msra.mxu0 0.0
  %1207 = vmatprep.subr.mxu0 0.0
  %1208 = vmatpush1.msra.mxu0 0.0
  %1209 = vmatprep.subr.mxu0 0.0
  %1210 = vmatpush1.msra.mxu0 0.0
  %1211 = vmatprep.subr.mxu0 0.0
  %1212 = vmatpush1.msra.mxu0 0.0
  %1213 = vmatprep.subr.mxu0 0.0
  %1214 = vmatpush1.msra.mxu0 0.0
  %1215 = vmatprep.subr.mxu0 0.0
  %1216 = vmatpush1.msra.mxu0 0.0
  %1217 = vmatprep.subr.mxu0 0.0
  %1218 = vmatpush1.msra.mxu0 0.0
  %1219 = vmatprep.subr.mxu0 0.0
  %1220 = vmatpush1.msra.mxu0 0.0
  %1221 = vmatprep.subr.mxu0 0.0
  %1222 = vmatpush1.msra.mxu0 0.0
  %1223 = vmatprep.subr.mxu0 0.0
  %1224 = vmatpush1.msra.mxu0 0.0
  %1225 = vmatprep.subr.mxu0 0.0
  %1226 = vmatpush1.msra.mxu0 0.0
  %1227 = vmatprep.subr.mxu0 0.0
  %1228 = vmatpush1.msra.mxu0 0.0
  %1229 = vmatprep.subr.mxu0 0.0
  %1230 = vmatpush1.msra.mxu0 %v1197
  %1231 = vmatprep.subr.mxu0 0.0
  %1232 = vmatpush2.msra.mxu0 0.0
  %1233 = vmatprep.subr.mxu0 0.0
  %1234 = vmatpush2.msra.mxu0 0.0
  %1235 = vmatprep.subr.mxu0 0.0
  %1236 = vmatpush2.msra.mxu0 0.0
  %1237 = vmatprep.subr.mxu0 0.0
  %1238 = vmatpush2.msra.mxu0 0.0
  %1239 = vmatprep.subr.mxu0 0.0
  %1240 = vmatpush2.msra.mxu0 0.0
  %1241 = vmatprep.subr.mxu0 0.0
  %1242 = vmatpush2.msra.mxu0 0.0
  %1243 = vmatprep.subr.mxu0 0.0
  %1244 = vmatpush2.msra.mxu0 0.0
  %1245 = vmatprep.subr.mxu0 0.0
  %1246 = vmatpush2.msra.mxu0 0.0
  %1247 = vmatprep.subr.mxu0 0.0
  %1248 = vmatpush2.msra.mxu0 0.0
  %1249 = vmatprep.subr.mxu0 0.0
  %1250 = vmatpush2.msra.mxu0 0.0
  %1251 = vmatprep.subr.mxu0 0.0
  %1252 = vmatpush2.msra.mxu0 0.0
  %1253 = vmatprep.subr.mxu0 0.0
  %1254 = vmatpush2.msra.mxu0 0.0
  %1255 = vmatprep.subr.mxu0 0.0
  %1256 = vmatpush2.msra.mxu0 0.0
  %1257 = vmatprep.subr.mxu0 0.0
  %1258 = vmatpush2.msra.mxu0 0.0
  %1259 = vmatprep.subr.mxu0 0.0
  %1260 = vmatpush2.msra.mxu0 0.0
  %1261 = vmatprep.subr.mxu0 0.0
  %1262 = vmatpush2.msra.mxu0 0.0
  %1263 = vmatprep.mubr.f32.mxu0 0.0
  %1264 = vmatmul.mubr.f32.gmra.mxu0 %v1194
  %v1265 = vpop.f32.mrf.mxu0
  %v1266 = vadd.f32 0.0, %v1265
  %v1267 = vpop.f32.mrf.mxu0
  %1268 = vdwg.mxu0
  %1269 = vmatprep.subr.mxu0 0.0
  %1270 = vmatpush1.msra.mxu0 0.0
  %1271 = vmatprep.subr.mxu0 0.0
  %1272 = vmatpush1.msra.mxu0 0.0
  %1273 = vmatprep.subr.mxu0 0.0
  %1274 = vmatpush1.msra.mxu0 0.0
  %1275 = vmatprep.subr.mxu0 0.0
  %1276 = vmatpush1.msra.mxu0 0.0
  %1277 = vmatprep.subr.mxu0 0.0
  %1278 = vmatpush1.msra.mxu0 0.0
  %1279 = vmatprep.subr.mxu0 0.0
  %1280 = vmatpush1.msra.mxu0 0.0
  %1281 = vmatprep.subr.mxu0 0.0
  %1282 = vmatpush1.msra.mxu0 0.0
  %1283 = vmatprep.subr.mxu0 0.0
  %1284 = vmatpush1.msra.mxu0 0.0
  %1285 = vmatprep.subr.mxu0 0.0
  %1286 = vmatpush1.msra.mxu0 0.0
  %1287 = vmatprep.subr.mxu0 0.0
  %1288 = vmatpush1.msra.mxu0 0.0
  %1289 = vmatprep.subr.mxu0 0.0
  %1290 = vmatpush1.msra.mxu0 0.0
  %1291 = vmatprep.subr.mxu0 0.0
  %1292 = vmatpush1.msra.mxu0 0.0
  %1293 = vmatprep.subr.mxu0 0.0
  %1294 = vmatpush1.msra.mxu0 0.0
  %1295 = vmatprep.subr.mxu0 0.0
  %1296 = vmatpush1.msra.mxu0 0.0
  %1297 = vmatprep.subr.mxu0 0.0
  %1298 = vmatpush1.msra.mxu0 0.0
  %1299 = vmatprep.subr.mxu0 0.0
  %1300 = vmatpush1.msra.mxu0 %v57
  %1301 = vmatprep.subr.mxu0 0.0
  %1302 = vmatpush2.msra.mxu0 0.0
  %1303 = vmatprep.subr.mxu0 0.0
  %1304 = vmatpush2.msra.mxu0 0.0
  %1305 = vmatprep.subr.mxu0 0.0
  %1306 = vmatpush2.msra.mxu0 0.0
  %1307 = vmatprep.subr.mxu0 0.0
  %1308 = vmatpush2.msra.mxu0 0.0
  %1309 = vmatprep.subr.mxu0 0.0
  %1310 = vmatpush2.msra.mxu0 0.0
  %1311 = vmatprep.subr.mxu0 0.0
  %1312 = vmatpush2.msra.mxu0 0.0
  %1313 = vmatprep.subr.mxu0 0.0
  %1314 = vmatpush2.msra.mxu0 0.0
  %1315 = vmatprep.subr.mxu0 0.0
  %1316 = vmatpush2.msra.mxu0 0.0
  %1317 = vmatprep.subr.mxu0 0.0
  %1318 = vmatpush2.msra.mxu0 0.0
  %1319 = vmatprep.subr.mxu0 0.0
  %1320 = vmatpush2.msra.mxu0 0.0
  %1321 = vmatprep.subr.mxu0 0.0
  %1322 = vmatpush2.msra.mxu0 0.0
  %1323 = vmatprep.subr.mxu0 0.0
  %1324 = vmatpush2.msra.mxu0 0.0
  %1325 = vmatprep.subr.mxu0 0.0
  %1326 = vmatpush2.msra.mxu0 0.0
  %1327 = vmatprep.subr.mxu0 0.0
  %1328 = vmatpush2.msra.mxu0 0.0
  %1329 = vmatprep.subr.mxu0 0.0
  %1330 = vmatpush2.msra.mxu0 0.0
  %1331 = vmatprep.subr.mxu0 0.0
  %1332 = vmatpush2.msra.mxu0 0.0
  %1333 = vmatprep.mubr.f32.mxu0 0.0
  %1334 = vmatmul.mubr.f32.gmra.mxu0 %v662
  %v1335 = vpop.f32.mrf.mxu0
  %v1336 = vadd.f32 0.0, %v1335
  %v1337 = vpop.f32.mrf.mxu0
  %1338 = vdwg.mxu0
  %1339 = vmatprep.subr.mxu0 0.0
  %1340 = vmatpush1.msra.mxu0 0.0
  %1341 = vmatprep.subr.mxu0 0.0
  %1342 = vmatpush1.msra.mxu0 0.0
  %1343 = vmatprep.subr.mxu0 0.0
  %1344 = vmatpush1.msra.mxu0 0.0
  %1345 = vmatprep.subr.mxu0 0.0
  %1346 = vmatpush1.msra.mxu0 0.0
  %1347 = vmatprep.subr.mxu0 0.0
  %1348 = vmatpush1.msra.mxu0 0.0
  %1349 = vmatprep.subr.mxu0 0.0
  %1350 = vmatpush1.msra.mxu0 0.0
  %1351 = vmatprep.subr.mxu0 0.0
  %1352 = vmatpush1.msra.mxu0 0.0
  %1353 = vmatprep.subr.mxu0 0.0
  %1354 = vmatpush1.msra.mxu0 0.0
  %1355 = vmatprep.subr.mxu0 0.0
  %1356 = vmatpush1.msra.mxu0 0.0
  %1357 = vmatprep.subr.mxu0 0.0
  %1358 = vmatpush1.msra.mxu0 0.0
  %1359 = vmatprep.subr.mxu0 0.0
  %1360 = vmatpush1.msra.mxu0 0.0
  %1361 = vmatprep.subr.mxu0 0.0
  %1362 = vmatpush1.msra.mxu0 0.0
  %1363 = vmatprep.subr.mxu0 0.0
  %1364 = vmatpush1.msra.mxu0 0.0
  %1365 = vmatprep.subr.mxu0 0.0
  %1366 = vmatpush1.msra.mxu0 0.0
  %1367 = vmatprep.subr.mxu0 0.0
  %1368 = vmatpush1.msra.mxu0 0.0
  %1369 = vmatprep.subr.mxu0 0.0
  %1370 = vmatpush1.msra.mxu0 %v133
  %1371 = vmatprep.subr.mxu0 0.0
  %1372 = vmatpush2.msra.mxu0 0.0
  %1373 = vmatprep.subr.mxu0 0.0
  %1374 = vmatpush2.msra.mxu0 0.0
  %1375 = vmatprep.subr.mxu0 0.0
  %1376 = vmatpush2.msra.mxu0 0.0
  %1377 = vmatprep.subr.mxu0 0.0
  %1378 = vmatpush2.msra.mxu0 0.0
  %1379 = vmatprep.subr.mxu0 0.0
  %1380 = vmatpush2.msra.mxu0 0.0
  %1381 = vmatprep.subr.mxu0 0.0
  %1382 = vmatpush2.msra.mxu0 0.0
  %1383 = vmatprep.subr.mxu0 0.0
  %1384 = vmatpush2.msra.mxu0 0.0
  %1385 = vmatprep.subr.mxu0 0.0
  %1386 = vmatpush2.msra.mxu0 0.0
  %1387 = vmatprep.subr.mxu0 0.0
  %1388 = vmatpush2.msra.mxu0 0.0
  %1389 = vmatprep.subr.mxu0 0.0
  %1390 = vmatpush2.msra.mxu0 0.0
  %1391 = vmatprep.subr.mxu0 0.0
  %1392 = vmatpush2.msra.mxu0 0.0
  %1393 = vmatprep.subr.mxu0 0.0
  %1394 = vmatpush2.msra.mxu0 0.0
  %1395 = vmatprep.subr.mxu0 0.0
  %1396 = vmatpush2.msra.mxu0 0.0
  %1397 = vmatprep.subr.mxu0 0.0
  %1398 = vmatpush2.msra.mxu0 0.0
  %1399 = vmatprep.subr.mxu0 0.0
  %1400 = vmatpush2.msra.mxu0 0.0
  %1401 = vmatprep.subr.mxu0 0.0
  %1402 = vmatpush2.msra.mxu0 0.0
  %1403 = vmatprep.mubr.f32.mxu0 0.0
  %1404 = vmatmul.mubr.f32.gmra.mxu0 %v738
  %v1405 = vpop.f32.mrf.mxu0
  %v1406 = vadd.f32 0.0, %v1405
  %v1407 = vpop.f32.mrf.mxu0
  %1408 = vdwg.mxu0
  %1409 = vmatprep.subr.mxu0 0.0
  %1410 = vmatpush1.msra.mxu0 0.0
  %1411 = vmatprep.subr.mxu0 0.0
  %1412 = vmatpush1.msra.mxu0 0.0
  %1413 = vmatprep.subr.mxu0 0.0
  %1414 = vmatpush1.msra.mxu0 0.0
  %1415 = vmatprep.subr.mxu0 0.0
  %1416 = vmatpush1.msra.mxu0 0.0
  %1417 = vmatprep.subr.mxu0 0.0
  %1418 = vmatpush1.msra.mxu0 0.0
  %1419 = vmatprep.subr.mxu0 0.0
  %1420 = vmatpush1.msra.mxu0 0.0
  %1421 = vmatprep.subr.mxu0 0.0
  %1422 = vmatpush1.msra.mxu0 0.0
  %1423 = vmatprep.subr.mxu0 0.0
  %1424 = vmatpush1.msra.mxu0 0.0
  %1425 = vmatprep.subr.mxu0 0.0
  %1426 = vmatpush1.msra.mxu0 0.0
  %1427 = vmatprep.subr.mxu0 0.0
  %1428 = vmatpush1.msra.mxu0 0.0
  %1429 = vmatprep.subr.mxu0 0.0
  %1430 = vmatpush1.msra.mxu0 0.0
  %1431 = vmatprep.subr.mxu0 0.0
  %1432 = vmatpush1.msra.mxu0 0.0
  %1433 = vmatprep.subr.mxu0 0.0
  %1434 = vmatpush1.msra.mxu0 0.0
  %1435 = vmatprep.subr.mxu0 0.0
  %1436 = vmatpush1.msra.mxu0 0.0
  %1437 = vmatprep.subr.mxu0 0.0
  %1438 = vmatpush1.msra.mxu0 0.0
  %1439 = vmatprep.subr.mxu0 0.0
  %1440 = vmatpush1.msra.mxu0 %v209
  %1441 = vmatprep.subr.mxu0 0.0
  %1442 = vmatpush2.msra.mxu0 0.0
  %1443 = vmatprep.subr.mxu0 0.0
  %1444 = vmatpush2.msra.mxu0 0.0
  %1445 = vmatprep.subr.mxu0 0.0
  %1446 = vmatpush2.msra.mxu0 0.0
  %1447 = vmatprep.subr.mxu0 0.0
  %1448 = vmatpush2.msra.mxu0 0.0
  %1449 = vmatprep.subr.mxu0 0.0
  %1450 = vmatpush2.msra.mxu0 0.0
  %1451 = vmatprep.subr.mxu0 0.0
  %1452 = vmatpush2.msra.mxu0 0.0
  %1453 = vmatprep.subr.mxu0 0.0
  %1454 = vmatpush2.msra.mxu0 0.0
  %1455 = vmatprep.subr.mxu0 0.0
  %1456 = vmatpush2.msra.mxu0 0.0
  %1457 = vmatprep.subr.mxu0 0.0
  %1458 = vmatpush2.msra.mxu0 0.0
  %1459 = vmatprep.subr.mxu0 0.0
  %1460 = vmatpush2.msra.mxu0 0.0
  %1461 = vmatprep.subr.mxu0 0.0
  %1462 = vmatpush2.msra.mxu0 0.0
  %1463 = vmatprep.subr.mxu0 0.0
  %1464 = vmatpush2.msra.mxu0 0.0
  %1465 = vmatprep.subr.mxu0 0.0
  %1466 = vmatpush2.msra.mxu0 0.0
  %1467 = vmatprep.subr.mxu0 0.0
  %1468 = vmatpush2.msra.mxu0 0.0
  %1469 = vmatprep.subr.mxu0 0.0
  %1470 = vmatpush2.msra.mxu0 0.0
  %1471 = vmatprep.subr.mxu0 0.0
  %1472 = vmatpush2.msra.mxu0 0.0
  %1473 = vmatprep.mubr.f32.mxu0 0.0
  %1474 = vmatmul.mubr.f32.gmra.mxu0 %v814
  %v1475 = vpop.f32.mrf.mxu0
  %v1476 = vadd.f32 0.0, %v1475
  %v1477 = vpop.f32.mrf.mxu0
  %1478 = vdwg.mxu0
  %1479 = vmatprep.subr.mxu0 0.0
  %1480 = vmatpush1.msra.mxu0 0.0
  %1481 = vmatprep.subr.mxu0 0.0
  %1482 = vmatpush1.msra.mxu0 0.0
  %1483 = vmatprep.subr.mxu0 0.0
  %1484 = vmatpush1.msra.mxu0 0.0
  %1485 = vmatprep.subr.mxu0 0.0
  %1486 = vmatpush1.msra.mxu0 0.0
  %1487 = vmatprep.subr.mxu0 0.0
  %1488 = vmatpush1.msra.mxu0 0.0
  %1489 = vmatprep.subr.mxu0 0.0
  %1490 = vmatpush1.msra.mxu0 0.0
  %1491 = vmatprep.subr.mxu0 0.0
  %1492 = vmatpush1.msra.mxu0 0.0
  %1493 = vmatprep.subr.mxu0 0.0
  %1494 = vmatpush1.msra.mxu0 0.0
  %1495 = vmatprep.subr.mxu0 0.0
  %1496 = vmatpush1.msra.mxu0 0.0
  %1497 = vmatprep.subr.mxu0 0.0
  %1498 = vmatpush1.msra.mxu0 0.0
  %1499 = vmatprep.subr.mxu0 0.0
  %1500 = vmatpush1.msra.mxu0 0.0
  %1501 = vmatprep.subr.mxu0 0.0
  %1502 = vmatpush1.msra.mxu0 0.0
  %1503 = vmatprep.subr.mxu0 0.0
  %1504 = vmatpush1.msra.mxu0 0.0
  %1505 = vmatprep.subr.mxu0 0.0
  %1506 = vmatpush1.msra.mxu0 0.0
  %1507 = vmatprep.subr.mxu0 0.0
  %1508 = vmatpush1.msra.mxu0 0.0
  %1509 = vmatprep.subr.mxu0 0.0
  %1510 = vmatpush1.msra.mxu0 %v285
  %1511 = vmatprep.subr.mxu0 0.0
  %1512 = vmatpush2.msra.mxu0 0.0
  %1513 = vmatprep.subr.mxu0 0.0
  %1514 = vmatpush2.msra.mxu0 0.0
  %1515 = vmatprep.subr.mxu0 0.0
  %1516 = vmatpush2.msra.mxu0 0.0
  %1517 = vmatprep.subr.mxu0 0.0
  %1518 = vmatpush2.msra.mxu0 0.0
  %1519 = vmatprep.subr.mxu0 0.0
  %1520 = vmatpush2.msra.mxu0 0.0
  %1521 = vmatprep.subr.mxu0 0.0
  %1522 = vmatpush2.msra.mxu0 0.0
  %1523 = vmatprep.subr.mxu0 0.0
  %1524 = vmatpush2.msra.mxu0 0.0
  %1525 = vmatprep.subr.mxu0 0.0
  %1526 = vmatpush2.msra.mxu0 0.0
  %1527 = vmatprep.subr.mxu0 0.0
  %1528 = vmatpush2.msra.mxu0 0.0
  %1529 = vmatprep.subr.mxu0 0.0
  %1530 = vmatpush2.msra.mxu0 0.0
  %1531 = vmatprep.subr.mxu0 0.0
  %1532 = vmatpush2.msra.mxu0 0.0
  %1533 = vmatprep.subr.mxu0 0.0
  %1534 = vmatpush2.msra.mxu0 0.0
  %1535 = vmatprep.subr.mxu0 0.0
  %1536 = vmatpush2.msra.mxu0 0.0
  %1537 = vmatprep.subr.mxu0 0.0
  %1538 = vmatpush2.msra.mxu0 0.0
  %1539 = vmatprep.subr.mxu0 0.0
  %1540 = vmatpush2.msra.mxu0 0.0
  %1541 = vmatprep.subr.mxu0 0.0
  %1542 = vmatpush2.msra.mxu0 0.0
  %1543 = vmatprep.mubr.f32.mxu0 0.0
  %1544 = vmatmul.mubr.f32.gmra.mxu0 %v890
  %v1545 = vpop.f32.mrf.mxu0
  %v1546 = vadd.f32 0.0, %v1545
  %v1547 = vpop.f32.mrf.mxu0
  %1548 = vdwg.mxu0
  %1549 = vmatprep.subr.mxu0 0.0
  %1550 = vmatpush1.msra.mxu0 0.0
  %1551 = vmatprep.subr.mxu0 0.0
  %1552 = vmatpush1.msra.mxu0 0.0
  %1553 = vmatprep.subr.mxu0 0.0
  %1554 = vmatpush1.msra.mxu0 0.0
  %1555 = vmatprep.subr.mxu0 0.0
  %1556 = vmatpush1.msra.mxu0 0.0
  %1557 = vmatprep.subr.mxu0 0.0
  %1558 = vmatpush1.msra.mxu0 0.0
  %1559 = vmatprep.subr.mxu0 0.0
  %1560 = vmatpush1.msra.mxu0 0.0
  %1561 = vmatprep.subr.mxu0 0.0
  %1562 = vmatpush1.msra.mxu0 0.0
  %1563 = vmatprep.subr.mxu0 0.0
  %1564 = vmatpush1.msra.mxu0 0.0
  %1565 = vmatprep.subr.mxu0 0.0
  %1566 = vmatpush1.msra.mxu0 0.0
  %1567 = vmatprep.subr.mxu0 0.0
  %1568 = vmatpush1.msra.mxu0 0.0
  %1569 = vmatprep.subr.mxu0 0.0
  %1570 = vmatpush1.msra.mxu0 0.0
  %1571 = vmatprep.subr.mxu0 0.0
  %1572 = vmatpush1.msra.mxu0 0.0
  %1573 = vmatprep.subr.mxu0 0.0
  %1574 = vmatpush1.msra.mxu0 0.0
  %1575 = vmatprep.subr.mxu0 0.0
  %1576 = vmatpush1.msra.mxu0 0.0
  %1577 = vmatprep.subr.mxu0 0.0
  %1578 = vmatpush1.msra.mxu0 0.0
  %1579 = vmatprep.subr.mxu0 0.0
  %1580 = vmatpush1.msra.mxu0 %v361
  %1581 = vmatprep.subr.mxu0 0.0
  %1582 = vmatpush2.msra.mxu0 0.0
  %1583 = vmatprep.subr.mxu0 0.0
  %1584 = vmatpush2.msra.mxu0 0.0
  %1585 = vmatprep.subr.mxu0 0.0
  %1586 = vmatpush2.msra.mxu0 0.0
  %1587 = vmatprep.subr.mxu0 0.0
  %1588 = vmatpush2.msra.mxu0 0.0
  %1589 = vmatprep.subr.mxu0 0.0
  %1590 = vmatpush2.msra.mxu0 0.0
  %1591 = vmatprep.subr.mxu0 0.0
  %1592 = vmatpush2.msra.mxu0 0.0
  %1593 = vmatprep.subr.mxu0 0.0
  %1594 = vmatpush2.msra.mxu0 0.0
  %1595 = vmatprep.subr.mxu0 0.0
  %1596 = vmatpush2.msra.mxu0 0.0
  %1597 = vmatprep.subr.mxu0 0.0
  %1598 = vmatpush2.msra.mxu0 0.0
  %1599 = vmatprep.subr.mxu0 0.0
  %1600 = vmatpush2.msra.mxu0 0.0
  %1601 = vmatprep.subr.mxu0 0.0
  %1602 = vmatpush2.msra.mxu0 0.0
  %1603 = vmatprep.subr.mxu0 0.0
  %1604 = vmatpush2.msra.mxu0 0.0
  %1605 = vmatprep.subr.mxu0 0.0
  %1606 = vmatpush2.msra.mxu0 0.0
  %1607 = vmatprep.subr.mxu0 0.0
  %1608 = vmatpush2.msra.mxu0 0.0
  %1609 = vmatprep.subr.mxu0 0.0
  %1610 = vmatpush2.msra.mxu0 0.0
  %1611 = vmatprep.subr.mxu0 0.0
  %1612 = vmatpush2.msra.mxu0 0.0
  %1613 = vmatprep.mubr.f32.mxu0 0.0
  %1614 = vmatmul.mubr.f32.gmra.mxu0 %v966
  %v1615 = vpop.f32.mrf.mxu0
  %v1616 = vadd.f32 0.0, %v1615
  %v1617 = vpop.f32.mrf.mxu0
  %1618 = vdwg.mxu0
  %1619 = vmatprep.subr.mxu0 0.0
  %1620 = vmatpush1.msra.mxu0 0.0
  %1621 = vmatprep.subr.mxu0 0.0
  %1622 = vmatpush1.msra.mxu0 0.0
  %1623 = vmatprep.subr.mxu0 0.0
  %1624 = vmatpush1.msra.mxu0 0.0
  %1625 = vmatprep.subr.mxu0 0.0
  %1626 = vmatpush1.msra.mxu0 0.0
  %1627 = vmatprep.subr.mxu0 0.0
  %1628 = vmatpush1.msra.mxu0 0.0
  %1629 = vmatprep.subr.mxu0 0.0
  %1630 = vmatpush1.msra.mxu0 0.0
  %1631 = vmatprep.subr.mxu0 0.0
  %1632 = vmatpush1.msra.mxu0 0.0
  %1633 = vmatprep.subr.mxu0 0.0
  %1634 = vmatpush1.msra.mxu0 0.0
  %1635 = vmatprep.subr.mxu0 0.0
  %1636 = vmatpush1.msra.mxu0 0.0
  %1637 = vmatprep.subr.mxu0 0.0
  %1638 = vmatpush1.msra.mxu0 0.0
  %1639 = vmatprep.subr.mxu0 0.0
  %1640 = vmatpush1.msra.mxu0 0.0
  %1641 = vmatprep.subr.mxu0 0.0
  %1642 = vmatpush1.msra.mxu0 0.0
  %1643 = vmatprep.subr.mxu0 0.0
  %1644 = vmatpush1.msra.mxu0 0.0
  %1645 = vmatprep.subr.mxu0 0.0
  %1646 = vmatpush1.msra.mxu0 0.0
  %1647 = vmatprep.subr.mxu0 0.0
  %1648 = vmatpush1.msra.mxu0 0.0
  %1649 = vmatprep.subr.mxu0 0.0
  %1650 = vmatpush1.msra.mxu0 %v437
  %1651 = vmatprep.subr.mxu0 0.0
  %1652 = vmatpush2.msra.mxu0 0.0
  %1653 = vmatprep.subr.mxu0 0.0
  %1654 = vmatpush2.msra.mxu0 0.0
  %1655 = vmatprep.subr.mxu0 0.0
  %1656 = vmatpush2.msra.mxu0 0.0
  %1657 = vmatprep.subr.mxu0 0.0
  %1658 = vmatpush2.msra.mxu0 0.0
  %1659 = vmatprep.subr.mxu0 0.0
  %1660 = vmatpush2.msra.mxu0 0.0
  %1661 = vmatprep.subr.mxu0 0.0
  %1662 = vmatpush2.msra.mxu0 0.0
  %1663 = vmatprep.subr.mxu0 0.0
  %1664 = vmatpush2.msra.mxu0 0.0
  %1665 = vmatprep.subr.mxu0 0.0
  %1666 = vmatpush2.msra.mxu0 0.0
  %1667 = vmatprep.subr.mxu0 0.0
  %1668 = vmatpush2.msra.mxu0 0.0
  %1669 = vmatprep.subr.mxu0 0.0
  %1670 = vmatpush2.msra.mxu0 0.0
  %1671 = vmatprep.subr.mxu0 0.0
  %1672 = vmatpush2.msra.mxu0 0.0
  %1673 = vmatprep.subr.mxu0 0.0
  %1674 = vmatpush2.msra.mxu0 0.0
  %1675 = vmatprep.subr.mxu0 0.0
  %1676 = vmatpush2.msra.mxu0 0.0
  %1677 = vmatprep.subr.mxu0 0.0
  %1678 = vmatpush2.msra.mxu0 0.0
  %1679 = vmatprep.subr.mxu0 0.0
  %1680 = vmatpush2.msra.mxu0 0.0
  %1681 = vmatprep.subr.mxu0 0.0
  %1682 = vmatpush2.msra.mxu0 0.0
  %1683 = vmatprep.mubr.f32.mxu0 0.0
  %1684 = vmatmul.mubr.f32.gmra.mxu0 %v1042
  %v1685 = vpop.f32.mrf.mxu0
  %v1686 = vadd.f32 0.0, %v1685
  %v1687 = vpop.f32.mrf.mxu0
  %1688 = vdwg.mxu0
  %1689 = vmatprep.subr.mxu0 0.0
  %1690 = vmatpush1.msra.mxu0 0.0
  %1691 = vmatprep.subr.mxu0 0.0
  %1692 = vmatpush1.msra.mxu0 0.0
  %1693 = vmatprep.subr.mxu0 0.0
  %1694 = vmatpush1.msra.mxu0 0.0
  %1695 = vmatprep.subr.mxu0 0.0
  %1696 = vmatpush1.msra.mxu0 0.0
  %1697 = vmatprep.subr.mxu0 0.0
  %1698 = vmatpush1.msra.mxu0 0.0
  %1699 = vmatprep.subr.mxu0 0.0
  %1700 = vmatpush1.msra.mxu0 0.0
  %1701 = vmatprep.subr.mxu0 0.0
  %1702 = vmatpush1.msra.mxu0 0.0
  %1703 = vmatprep.subr.mxu0 0.0
  %1704 = vmatpush1.msra.mxu0 0.0
  %1705 = vmatprep.subr.mxu0 0.0
  %1706 = vmatpush1.msra.mxu0 0.0
  %1707 = vmatprep.subr.mxu0 0.0
  %1708 = vmatpush1.msra.mxu0 0.0
  %1709 = vmatprep.subr.mxu0 0.0
  %1710 = vmatpush1.msra.mxu0 0.0
  %1711 = vmatprep.subr.mxu0 0.0
  %1712 = vmatpush1.msra.mxu0 0.0
  %1713 = vmatprep.subr.mxu0 0.0
  %1714 = vmatpush1.msra.mxu0 0.0
  %1715 = vmatprep.subr.mxu0 0.0
  %1716 = vmatpush1.msra.mxu0 0.0
  %1717 = vmatprep.subr.mxu0 0.0
  %1718 = vmatpush1.msra.mxu0 0.0
  %1719 = vmatprep.subr.mxu0 0.0
  %1720 = vmatpush1.msra.mxu0 %v513
  %1721 = vmatprep.subr.mxu0 0.0
  %1722 = vmatpush2.msra.mxu0 0.0
  %1723 = vmatprep.subr.mxu0 0.0
  %1724 = vmatpush2.msra.mxu0 0.0
  %1725 = vmatprep.subr.mxu0 0.0
  %1726 = vmatpush2.msra.mxu0 0.0
  %1727 = vmatprep.subr.mxu0 0.0
  %1728 = vmatpush2.msra.mxu0 0.0
  %1729 = vmatprep.subr.mxu0 0.0
  %1730 = vmatpush2.msra.mxu0 0.0
  %1731 = vmatprep.subr.mxu0 0.0
  %1732 = vmatpush2.msra.mxu0 0.0
  %1733 = vmatprep.subr.mxu0 0.0
  %1734 = vmatpush2.msra.mxu0 0.0
  %1735 = vmatprep.subr.mxu0 0.0
  %1736 = vmatpush2.msra.mxu0 0.0
  %1737 = vmatprep.subr.mxu0 0.0
  %1738 = vmatpush2.msra.mxu0 0.0
  %1739 = vmatprep.subr.mxu0 0.0
  %1740 = vmatpush2.msra.mxu0 0.0
  %1741 = vmatprep.subr.mxu0 0.0
  %1742 = vmatpush2.msra.mxu0 0.0
  %1743 = vmatprep.subr.mxu0 0.0
  %1744 = vmatpush2.msra.mxu0 0.0
  %1745 = vmatprep.subr.mxu0 0.0
  %1746 = vmatpush2.msra.mxu0 0.0
  %1747 = vmatprep.subr.mxu0 0.0
  %1748 = vmatpush2.msra.mxu0 0.0
  %1749 = vmatprep.subr.mxu0 0.0
  %1750 = vmatpush2.msra.mxu0 0.0
  %1751 = vmatprep.subr.mxu0 0.0
  %1752 = vmatpush2.msra.mxu0 0.0
  %1753 = vmatprep.mubr.f32.mxu0 0.0
  %1754 = vmatmul.mubr.f32.gmra.mxu0 %v1118
  %v1755 = vpop.f32.mrf.mxu0
  %v1756 = vadd.f32 0.0, %v1755
  %v1757 = vpop.f32.mrf.mxu0
  %1758 = vdwg.mxu0
  %1759 = vmatprep.subr.mxu0 0.0
  %1760 = vmatpush1.msra.mxu0 0.0
  %1761 = vmatprep.subr.mxu0 0.0
  %1762 = vmatpush1.msra.mxu0 0.0
  %1763 = vmatprep.subr.mxu0 0.0
  %1764 = vmatpush1.msra.mxu0 0.0
  %1765 = vmatprep.subr.mxu0 0.0
  %1766 = vmatpush1.msra.mxu0 0.0
  %1767 = vmatprep.subr.mxu0 0.0
  %1768 = vmatpush1.msra.mxu0 0.0
  %1769 = vmatprep.subr.mxu0 0.0
  %1770 = vmatpush1.msra.mxu0 0.0
  %1771 = vmatprep.subr.mxu0 0.0
  %1772 = vmatpush1.msra.mxu0 0.0
  %1773 = vmatprep.subr.mxu0 0.0
  %1774 = vmatpush1.msra.mxu0 0.0
  %1775 = vmatprep.subr.mxu0 0.0
  %1776 = vmatpush1.msra.mxu0 0.0
  %1777 = vmatprep.subr.mxu0 0.0
  %1778 = vmatpush1.msra.mxu0 0.0
  %1779 = vmatprep.subr.mxu0 0.0
  %1780 = vmatpush1.msra.mxu0 0.0
  %1781 = vmatprep.subr.mxu0 0.0
  %1782 = vmatpush1.msra.mxu0 0.0
  %1783 = vmatprep.subr.mxu0 0.0
  %1784 = vmatpush1.msra.mxu0 0.0
  %1785 = vmatprep.subr.mxu0 0.0
  %1786 = vmatpush1.msra.mxu0 0.0
  %1787 = vmatprep.subr.mxu0 0.0
  %1788 = vmatpush1.msra.mxu0 0.0
  %1789 = vmatprep.subr.mxu0 0.0
  %1790 = vmatpush1.msra.mxu0 %v589
  %1791 = vmatprep.subr.mxu0 0.0
  %1792 = vmatpush2.msra.mxu0 0.0
  %1793 = vmatprep.subr.mxu0 0.0
  %1794 = vmatpush2.msra.mxu0 0.0
  %1795 = vmatprep.subr.mxu0 0.0
  %1796 = vmatpush2.msra.mxu0 0.0
  %1797 = vmatprep.subr.mxu0 0.0
  %1798 = vmatpush2.msra.mxu0 0.0
  %1799 = vmatprep.subr.mxu0 0.0
  %1800 = vmatpush2.msra.mxu0 0.0
  %1801 = vmatprep.subr.mxu0 0.0
  %1802 = vmatpush2.msra.mxu0 0.0
  %1803 = vmatprep.subr.mxu0 0.0
  %1804 = vmatpush2.msra.mxu0 0.0
  %1805 = vmatprep.subr.mxu0 0.0
  %1806 = vmatpush2.msra.mxu0 0.0
  %1807 = vmatprep.subr.mxu0 0.0
  %1808 = vmatpush2.msra.mxu0 0.0
  %1809 = vmatprep.subr.mxu0 0.0
  %1810 = vmatpush2.msra.mxu0 0.0
  %1811 = vmatprep.subr.mxu0 0.0
  %1812 = vmatpush2.msra.mxu0 0.0
  %1813 = vmatprep.subr.mxu0 0.0
  %1814 = vmatpush2.msra.mxu0 0.0
  %1815 = vmatprep.subr.mxu0 0.0
  %1816 = vmatpush2.msra.mxu0 0.0
  %1817 = vmatprep.subr.mxu0 0.0
  %1818 = vmatpush2.msra.mxu0 0.0
  %1819 = vmatprep.subr.mxu0 0.0
  %1820 = vmatpush2.msra.mxu0 0.0
  %1821 = vmatprep.subr.mxu0 0.0
  %1822 = vmatpush2.msra.mxu0 0.0
  %1823 = vmatprep.mubr.f32.mxu0 0.0
  %1824 = vmatmul.mubr.f32.gmra.mxu0 %v1194
  %v1825 = vpop.f32.mrf.mxu0
  %v1826 = vadd.f32 0.0, %v1825
  %v1827 = vpop.f32.mrf.mxu0
  %1828 = vdwg.mxu0
  %v1829 = vsub.f32 %v126, %v734
  %v1830 = vsub.f32 %v202, %v810
  %v1831 = vsub.f32 %v278, %v886
  %v1832 = vsub.f32 %v354, %v962
  %v1833 = vsub.f32 %v430, %v1038
  %v1834 = vsub.f32 %v506, %v1114
  %v1835 = vsub.f32 %v582, %v1190
  %v1836 = vsub.f32 %v658, %v1266
  %1837 = vst.msk [vmem:[%s4] sm:$0xff] %vm51, %v1829
  %1838 = vst.msk [vmem:[%s4 + $0x8] sm:$0xff] %vm51, %v1830
  %1839 = vst.msk [vmem:[%s4 + $0x10] sm:$0xff] %vm51, %v1831
  %1840 = vst.msk [vmem:[%s4 + $0x18] sm:$0xff] %vm51, %v1832
  %1841 = vst.msk [vmem:[%s4 + $0x20] sm:$0xff] %vm51, %v1833
  %1842 = vst.msk [vmem:[%s4 + $0x28] sm:$0xff] %vm51, %v1834
  %1843 = vst.msk [vmem:[%s4 + $0x30] sm:$0xff] %vm51, %v1835
  %1844 = vst.msk [vmem:[%s4 + $0x38] sm:$0xff] %vm51, %v1836
  %1845 = vmatprep.subr.mxu0 0.0
  %1846 = vmatpush1.msra.mxu0 0.0
  %1847 = vmatprep.subr.mxu0 0.0
  %1848 = vmatpush1.msra.mxu0 0.0
  %1849 = vmatprep.subr.mxu0 0.0
  %1850 = vmatpush1.msra.mxu0 0.0
  %1851 = vmatprep.subr.mxu0 0.0
  %1852 = vmatpush1.msra.mxu0 0.0
  %1853 = vmatprep.subr.mxu0 0.0
  %1854 = vmatpush1.msra.mxu0 0.0
  %1855 = vmatprep.subr.mxu0 0.0
  %1856 = vmatpush1.msra.mxu0 0.0
  %1857 = vmatprep.subr.mxu0 0.0
  %1858 = vmatpush1.msra.mxu0 0.0
  %1859 = vmatprep.subr.mxu0 0.0
  %1860 = vmatpush1.msra.mxu0 0.0
  %1861 = vmatprep.subr.mxu0 0.0
  %1862 = vmatpush1.msra.mxu0 0.0
  %1863 = vmatprep.subr.mxu0 0.0
  %1864 = vmatpush1.msra.mxu0 0.0
  %1865 = vmatprep.subr.mxu0 0.0
  %1866 = vmatpush1.msra.mxu0 0.0
  %1867 = vmatprep.subr.mxu0 0.0
  %1868 = vmatpush1.msra.mxu0 0.0
  %1869 = vmatprep.subr.mxu0 0.0
  %1870 = vmatpush1.msra.mxu0 0.0
  %1871 = vmatprep.subr.mxu0 0.0
  %1872 = vmatpush1.msra.mxu0 0.0
  %1873 = vmatprep.subr.mxu0 0.0
  %1874 = vmatpush1.msra.mxu0 0.0
  %1875 = vmatprep.subr.mxu0 0.0
  %1876 = vmatpush1.msra.mxu0 %v665
  %1877 = vmatprep.subr.mxu0 0.0
  %1878 = vmatpush2.msra.mxu0 0.0
  %1879 = vmatprep.subr.mxu0 0.0
  %1880 = vmatpush2.msra.mxu0 0.0
  %1881 = vmatprep.subr.mxu0 0.0
  %1882 = vmatpush2.msra.mxu0 0.0
  %1883 = vmatprep.subr.mxu0 0.0
  %1884 = vmatpush2.msra.mxu0 0.0
  %1885 = vmatprep.subr.mxu0 0.0
  %1886 = vmatpush2.msra.mxu0 0.0
  %1887 = vmatprep.subr.mxu0 0.0
  %1888 = vmatpush2.msra.mxu0 0.0
  %1889 = vmatprep.subr.mxu0 0.0
  %1890 = vmatpush2.msra.mxu0 0.0
  %1891 = vmatprep.subr.mxu0 0.0
  %1892 = vmatpush2.msra.mxu0 0.0
  %1893 = vmatprep.subr.mxu0 0.0
  %1894 = vmatpush2.msra.mxu0 0.0
  %1895 = vmatprep.subr.mxu0 0.0
  %1896 = vmatpush2.msra.mxu0 0.0
  %1897 = vmatprep.subr.mxu0 0.0
  %1898 = vmatpush2.msra.mxu0 0.0
  %1899 = vmatprep.subr.mxu0 0.0
  %1900 = vmatpush2.msra.mxu0 0.0
  %1901 = vmatprep.subr.mxu0 0.0
  %1902 = vmatpush2.msra.mxu0 0.0
  %1903 = vmatprep.subr.mxu0 0.0
  %1904 = vmatpush2.msra.mxu0 0.0
  %1905 = vmatprep.subr.mxu0 0.0
  %1906 = vmatpush2.msra.mxu0 0.0
  %1907 = vmatprep.subr.mxu0 0.0
  %1908 = vmatpush2.msra.mxu0 0.0
  %1909 = vmatprep.mubr.f32.mxu0 0.0
  %1910 = vmatmul.mubr.f32.gmra.mxu0 %v53
  %v1911 = vpop.f32.mrf.mxu0
  %v1912 = vadd.f32 %v1336, %v1911
  %v1913 = vpop.f32.mrf.mxu0
  %1914 = vdwg.mxu0
  %1915 = vmatprep.subr.mxu0 0.0
  %1916 = vmatpush1.msra.mxu0 0.0
  %1917 = vmatprep.subr.mxu0 0.0
  %1918 = vmatpush1.msra.mxu0 0.0
  %1919 = vmatprep.subr.mxu0 0.0
  %1920 = vmatpush1.msra.mxu0 0.0
  %1921 = vmatprep.subr.mxu0 0.0
  %1922 = vmatpush1.msra.mxu0 0.0
  %1923 = vmatprep.subr.mxu0 0.0
  %1924 = vmatpush1.msra.mxu0 0.0
  %1925 = vmatprep.subr.mxu0 0.0
  %1926 = vmatpush1.msra.mxu0 0.0
  %1927 = vmatprep.subr.mxu0 0.0
  %1928 = vmatpush1.msra.mxu0 0.0
  %1929 = vmatprep.subr.mxu0 0.0
  %1930 = vmatpush1.msra.mxu0 0.0
  %1931 = vmatprep.subr.mxu0 0.0
  %1932 = vmatpush1.msra.mxu0 0.0
  %1933 = vmatprep.subr.mxu0 0.0
  %1934 = vmatpush1.msra.mxu0 0.0
  %1935 = vmatprep.subr.mxu0 0.0
  %1936 = vmatpush1.msra.mxu0 0.0
  %1937 = vmatprep.subr.mxu0 0.0
  %1938 = vmatpush1.msra.mxu0 0.0
  %1939 = vmatprep.subr.mxu0 0.0
  %1940 = vmatpush1.msra.mxu0 0.0
  %1941 = vmatprep.subr.mxu0 0.0
  %1942 = vmatpush1.msra.mxu0 0.0
  %1943 = vmatprep.subr.mxu0 0.0
  %1944 = vmatpush1.msra.mxu0 0.0
  %1945 = vmatprep.subr.mxu0 0.0
  %1946 = vmatpush1.msra.mxu0 %v741
  %1947 = vmatprep.subr.mxu0 0.0
  %1948 = vmatpush2.msra.mxu0 0.0
  %1949 = vmatprep.subr.mxu0 0.0
  %1950 = vmatpush2.msra.mxu0 0.0
  %1951 = vmatprep.subr.mxu0 0.0
  %1952 = vmatpush2.msra.mxu0 0.0
  %1953 = vmatprep.subr.mxu0 0.0
  %1954 = vmatpush2.msra.mxu0 0.0
  %1955 = vmatprep.subr.mxu0 0.0
  %1956 = vmatpush2.msra.mxu0 0.0
  %1957 = vmatprep.subr.mxu0 0.0
  %1958 = vmatpush2.msra.mxu0 0.0
  %1959 = vmatprep.subr.mxu0 0.0
  %1960 = vmatpush2.msra.mxu0 0.0
  %1961 = vmatprep.subr.mxu0 0.0
  %1962 = vmatpush2.msra.mxu0 0.0
  %1963 = vmatprep.subr.mxu0 0.0
  %1964 = vmatpush2.msra.mxu0 0.0
  %1965 = vmatprep.subr.mxu0 0.0
  %1966 = vmatpush2.msra.mxu0 0.0
  %1967 = vmatprep.subr.mxu0 0.0
  %1968 = vmatpush2.msra.mxu0 0.0
  %1969 = vmatprep.subr.mxu0 0.0
  %1970 = vmatpush2.msra.mxu0 0.0
  %1971 = vmatprep.subr.mxu0 0.0
  %1972 = vmatpush2.msra.mxu0 0.0
  %1973 = vmatprep.subr.mxu0 0.0
  %1974 = vmatpush2.msra.mxu0 0.0
  %1975 = vmatprep.subr.mxu0 0.0
  %1976 = vmatpush2.msra.mxu0 0.0
  %1977 = vmatprep.subr.mxu0 0.0
  %1978 = vmatpush2.msra.mxu0 0.0
  %1979 = vmatprep.mubr.f32.mxu0 0.0
  %1980 = vmatmul.mubr.f32.gmra.mxu0 %v130
  %v1981 = vpop.f32.mrf.mxu0
  %v1982 = vadd.f32 %v1406, %v1981
  %v1983 = vpop.f32.mrf.mxu0
  %1984 = vdwg.mxu0
  %1985 = vmatprep.subr.mxu0 0.0
  %1986 = vmatpush1.msra.mxu0 0.0
  %1987 = vmatprep.subr.mxu0 0.0
  %1988 = vmatpush1.msra.mxu0 0.0
  %1989 = vmatprep.subr.mxu0 0.0
  %1990 = vmatpush1.msra.mxu0 0.0
  %1991 = vmatprep.subr.mxu0 0.0
  %1992 = vmatpush1.msra.mxu0 0.0
  %1993 = vmatprep.subr.mxu0 0.0
  %1994 = vmatpush1.msra.mxu0 0.0
  %1995 = vmatprep.subr.mxu0 0.0
  %1996 = vmatpush1.msra.mxu0 0.0
  %1997 = vmatprep.subr.mxu0 0.0
  %1998 = vmatpush1.msra.mxu0 0.0
  %1999 = vmatprep.subr.mxu0 0.0
  %2000 = vmatpush1.msra.mxu0 0.0
  %2001 = vmatprep.subr.mxu0 0.0
  %2002 = vmatpush1.msra.mxu0 0.0
  %2003 = vmatprep.subr.mxu0 0.0
  %2004 = vmatpush1.msra.mxu0 0.0
  %2005 = vmatprep.subr.mxu0 0.0
  %2006 = vmatpush1.msra.mxu0 0.0
  %2007 = vmatprep.subr.mxu0 0.0
  %2008 = vmatpush1.msra.mxu0 0.0
  %2009 = vmatprep.subr.mxu0 0.0
  %2010 = vmatpush1.msra.mxu0 0.0
  %2011 = vmatprep.subr.mxu0 0.0
  %2012 = vmatpush1.msra.mxu0 0.0
  %2013 = vmatprep.subr.mxu0 0.0
  %2014 = vmatpush1.msra.mxu0 0.0
  %2015 = vmatprep.subr.mxu0 0.0
  %2016 = vmatpush1.msra.mxu0 %v817
  %2017 = vmatprep.subr.mxu0 0.0
  %2018 = vmatpush2.msra.mxu0 0.0
  %2019 = vmatprep.subr.mxu0 0.0
  %2020 = vmatpush2.msra.mxu0 0.0
  %2021 = vmatprep.subr.mxu0 0.0
  %2022 = vmatpush2.msra.mxu0 0.0
  %2023 = vmatprep.subr.mxu0 0.0
  %2024 = vmatpush2.msra.mxu0 0.0
  %2025 = vmatprep.subr.mxu0 0.0
  %2026 = vmatpush2.msra.mxu0 0.0
  %2027 = vmatprep.subr.mxu0 0.0
  %2028 = vmatpush2.msra.mxu0 0.0
  %2029 = vmatprep.subr.mxu0 0.0
  %2030 = vmatpush2.msra.mxu0 0.0
  %2031 = vmatprep.subr.mxu0 0.0
  %2032 = vmatpush2.msra.mxu0 0.0
  %2033 = vmatprep.subr.mxu0 0.0
  %2034 = vmatpush2.msra.mxu0 0.0
  %2035 = vmatprep.subr.mxu0 0.0
  %2036 = vmatpush2.msra.mxu0 0.0
  %2037 = vmatprep.subr.mxu0 0.0
  %2038 = vmatpush2.msra.mxu0 0.0
  %2039 = vmatprep.subr.mxu0 0.0
  %2040 = vmatpush2.msra.mxu0 0.0
  %2041 = vmatprep.subr.mxu0 0.0
  %2042 = vmatpush2.msra.mxu0 0.0
  %2043 = vmatprep.subr.mxu0 0.0
  %2044 = vmatpush2.msra.mxu0 0.0
  %2045 = vmatprep.subr.mxu0 0.0
  %2046 = vmatpush2.msra.mxu0 0.0
  %2047 = vmatprep.subr.mxu0 0.0
  %2048 = vmatpush2.msra.mxu0 0.0
  %2049 = vmatprep.mubr.f32.mxu0 0.0
  %2050 = vmatmul.mubr.f32.gmra.mxu0 %v206
  %v2051 = vpop.f32.mrf.mxu0
  %v2052 = vadd.f32 %v1476, %v2051
  %v2053 = vpop.f32.mrf.mxu0
  %2054 = vdwg.mxu0
  %2055 = vmatprep.subr.mxu0 0.0
  %2056 = vmatpush1.msra.mxu0 0.0
  %2057 = vmatprep.subr.mxu0 0.0
  %2058 = vmatpush1.msra.mxu0 0.0
  %2059 = vmatprep.subr.mxu0 0.0
  %2060 = vmatpush1.msra.mxu0 0.0
  %2061 = vmatprep.subr.mxu0 0.0
  %2062 = vmatpush1.msra.mxu0 0.0
  %2063 = vmatprep.subr.mxu0 0.0
  %2064 = vmatpush1.msra.mxu0 0.0
  %2065 = vmatprep.subr.mxu0 0.0
  %2066 = vmatpush1.msra.mxu0 0.0
  %2067 = vmatprep.subr.mxu0 0.0
  %2068 = vmatpush1.msra.mxu0 0.0
  %2069 = vmatprep.subr.mxu0 0.0
  %2070 = vmatpush1.msra.mxu0 0.0
  %2071 = vmatprep.subr.mxu0 0.0
  %2072 = vmatpush1.msra.mxu0 0.0
  %2073 = vmatprep.subr.mxu0 0.0
  %2074 = vmatpush1.msra.mxu0 0.0
  %2075 = vmatprep.subr.mxu0 0.0
  %2076 = vmatpush1.msra.mxu0 0.0
  %2077 = vmatprep.subr.mxu0 0.0
  %2078 = vmatpush1.msra.mxu0 0.0
  %2079 = vmatprep.subr.mxu0 0.0
  %2080 = vmatpush1.msra.mxu0 0.0
  %2081 = vmatprep.subr.mxu0 0.0
  %2082 = vmatpush1.msra.mxu0 0.0
  %2083 = vmatprep.subr.mxu0 0.0
  %2084 = vmatpush1.msra.mxu0 0.0
  %2085 = vmatprep.subr.mxu0 0.0
  %2086 = vmatpush1.msra.mxu0 %v893
  %2087 = vmatprep.subr.mxu0 0.0
  %2088 = vmatpush2.msra.mxu0 0.0
  %2089 = vmatprep.subr.mxu0 0.0
  %2090 = vmatpush2.msra.mxu0 0.0
  %2091 = vmatprep.subr.mxu0 0.0
  %2092 = vmatpush2.msra.mxu0 0.0
  %2093 = vmatprep.subr.mxu0 0.0
  %2094 = vmatpush2.msra.mxu0 0.0
  %2095 = vmatprep.subr.mxu0 0.0
  %2096 = vmatpush2.msra.mxu0 0.0
  %2097 = vmatprep.subr.mxu0 0.0
  %2098 = vmatpush2.msra.mxu0 0.0
  %2099 = vmatprep.subr.mxu0 0.0
  %2100 = vmatpush2.msra.mxu0 0.0
  %2101 = vmatprep.subr.mxu0 0.0
  %2102 = vmatpush2.msra.mxu0 0.0
  %2103 = vmatprep.subr.mxu0 0.0
  %2104 = vmatpush2.msra.mxu0 0.0
  %2105 = vmatprep.subr.mxu0 0.0
  %2106 = vmatpush2.msra.mxu0 0.0
  %2107 = vmatprep.subr.mxu0 0.0
  %2108 = vmatpush2.msra.mxu0 0.0
  %2109 = vmatprep.subr.mxu0 0.0
  %2110 = vmatpush2.msra.mxu0 0.0
  %2111 = vmatprep.subr.mxu0 0.0
  %2112 = vmatpush2.msra.mxu0 0.0
  %2113 = vmatprep.subr.mxu0 0.0
  %2114 = vmatpush2.msra.mxu0 0.0
  %2115 = vmatprep.subr.mxu0 0.0
  %2116 = vmatpush2.msra.mxu0 0.0
  %2117 = vmatprep.subr.mxu0 0.0
  %2118 = vmatpush2.msra.mxu0 0.0
  %2119 = vmatprep.mubr.f32.mxu0 0.0
  %2120 = vmatmul.mubr.f32.gmra.mxu0 %v282
  %v2121 = vpop.f32.mrf.mxu0
  %v2122 = vadd.f32 %v1546, %v2121
  %v2123 = vpop.f32.mrf.mxu0
  %2124 = vdwg.mxu0
  %2125 = vmatprep.subr.mxu0 0.0
  %2126 = vmatpush1.msra.mxu0 0.0
  %2127 = vmatprep.subr.mxu0 0.0
  %2128 = vmatpush1.msra.mxu0 0.0
  %2129 = vmatprep.subr.mxu0 0.0
  %2130 = vmatpush1.msra.mxu0 0.0
  %2131 = vmatprep.subr.mxu0 0.0
  %2132 = vmatpush1.msra.mxu0 0.0
  %2133 = vmatprep.subr.mxu0 0.0
  %2134 = vmatpush1.msra.mxu0 0.0
  %2135 = vmatprep.subr.mxu0 0.0
  %2136 = vmatpush1.msra.mxu0 0.0
  %2137 = vmatprep.subr.mxu0 0.0
  %2138 = vmatpush1.msra.mxu0 0.0
  %2139 = vmatprep.subr.mxu0 0.0
  %2140 = vmatpush1.msra.mxu0 0.0
  %2141 = vmatprep.subr.mxu0 0.0
  %2142 = vmatpush1.msra.mxu0 0.0
  %2143 = vmatprep.subr.mxu0 0.0
  %2144 = vmatpush1.msra.mxu0 0.0
  %2145 = vmatprep.subr.mxu0 0.0
  %2146 = vmatpush1.msra.mxu0 0.0
  %2147 = vmatprep.subr.mxu0 0.0
  %2148 = vmatpush1.msra.mxu0 0.0
  %2149 = vmatprep.subr.mxu0 0.0
  %2150 = vmatpush1.msra.mxu0 0.0
  %2151 = vmatprep.subr.mxu0 0.0
  %2152 = vmatpush1.msra.mxu0 0.0
  %2153 = vmatprep.subr.mxu0 0.0
  %2154 = vmatpush1.msra.mxu0 0.0
  %2155 = vmatprep.subr.mxu0 0.0
  %2156 = vmatpush1.msra.mxu0 %v969
  %2157 = vmatprep.subr.mxu0 0.0
  %2158 = vmatpush2.msra.mxu0 0.0
  %2159 = vmatprep.subr.mxu0 0.0
  %2160 = vmatpush2.msra.mxu0 0.0
  %2161 = vmatprep.subr.mxu0 0.0
  %2162 = vmatpush2.msra.mxu0 0.0
  %2163 = vmatprep.subr.mxu0 0.0
  %2164 = vmatpush2.msra.mxu0 0.0
  %2165 = vmatprep.subr.mxu0 0.0
  %2166 = vmatpush2.msra.mxu0 0.0
  %2167 = vmatprep.subr.mxu0 0.0
  %2168 = vmatpush2.msra.mxu0 0.0
  %2169 = vmatprep.subr.mxu0 0.0
  %2170 = vmatpush2.msra.mxu0 0.0
  %2171 = vmatprep.subr.mxu0 0.0
  %2172 = vmatpush2.msra.mxu0 0.0
  %2173 = vmatprep.subr.mxu0 0.0
  %2174 = vmatpush2.msra.mxu0 0.0
  %2175 = vmatprep.subr.mxu0 0.0
  %2176 = vmatpush2.msra.mxu0 0.0
  %2177 = vmatprep.subr.mxu0 0.0
  %2178 = vmatpush2.msra.mxu0 0.0
  %2179 = vmatprep.subr.mxu0 0.0
  %2180 = vmatpush2.msra.mxu0 0.0
  %2181 = vmatprep.subr.mxu0 0.0
  %2182 = vmatpush2.msra.mxu0 0.0
  %2183 = vmatprep.subr.mxu0 0.0
  %2184 = vmatpush2.msra.mxu0 0.0
  %2185 = vmatprep.subr.mxu0 0.0
  %2186 = vmatpush2.msra.mxu0 0.0
  %2187 = vmatprep.subr.mxu0 0.0
  %2188 = vmatpush2.msra.mxu0 0.0
  %2189 = vmatprep.mubr.f32.mxu0 0.0
  %2190 = vmatmul.mubr.f32.gmra.mxu0 %v358
  %v2191 = vpop.f32.mrf.mxu0
  %v2192 = vadd.f32 %v1616, %v2191
  %v2193 = vpop.f32.mrf.mxu0
  %2194 = vdwg.mxu0
  %2195 = vmatprep.subr.mxu0 0.0
  %2196 = vmatpush1.msra.mxu0 0.0
  %2197 = vmatprep.subr.mxu0 0.0
  %2198 = vmatpush1.msra.mxu0 0.0
  %2199 = vmatprep.subr.mxu0 0.0
  %2200 = vmatpush1.msra.mxu0 0.0
  %2201 = vmatprep.subr.mxu0 0.0
  %2202 = vmatpush1.msra.mxu0 0.0
  %2203 = vmatprep.subr.mxu0 0.0
  %2204 = vmatpush1.msra.mxu0 0.0
  %2205 = vmatprep.subr.mxu0 0.0
  %2206 = vmatpush1.msra.mxu0 0.0
  %2207 = vmatprep.subr.mxu0 0.0
  %2208 = vmatpush1.msra.mxu0 0.0
  %2209 = vmatprep.subr.mxu0 0.0
  %2210 = vmatpush1.msra.mxu0 0.0
  %2211 = vmatprep.subr.mxu0 0.0
  %2212 = vmatpush1.msra.mxu0 0.0
  %2213 = vmatprep.subr.mxu0 0.0
  %2214 = vmatpush1.msra.mxu0 0.0
  %2215 = vmatprep.subr.mxu0 0.0
  %2216 = vmatpush1.msra.mxu0 0.0
  %2217 = vmatprep.subr.mxu0 0.0
  %2218 = vmatpush1.msra.mxu0 0.0
  %2219 = vmatprep.subr.mxu0 0.0
  %2220 = vmatpush1.msra.mxu0 0.0
  %2221 = vmatprep.subr.mxu0 0.0
  %2222 = vmatpush1.msra.mxu0 0.0
  %2223 = vmatprep.subr.mxu0 0.0
  %2224 = vmatpush1.msra.mxu0 0.0
  %2225 = vmatprep.subr.mxu0 0.0
  %2226 = vmatpush1.msra.mxu0 %v1045
  %2227 = vmatprep.subr.mxu0 0.0
  %2228 = vmatpush2.msra.mxu0 0.0
  %2229 = vmatprep.subr.mxu0 0.0
  %2230 = vmatpush2.msra.mxu0 0.0
  %2231 = vmatprep.subr.mxu0 0.0
  %2232 = vmatpush2.msra.mxu0 0.0
  %2233 = vmatprep.subr.mxu0 0.0
  %2234 = vmatpush2.msra.mxu0 0.0
  %2235 = vmatprep.subr.mxu0 0.0
  %2236 = vmatpush2.msra.mxu0 0.0
  %2237 = vmatprep.subr.mxu0 0.0
  %2238 = vmatpush2.msra.mxu0 0.0
  %2239 = vmatprep.subr.mxu0 0.0
  %2240 = vmatpush2.msra.mxu0 0.0
  %2241 = vmatprep.subr.mxu0 0.0
  %2242 = vmatpush2.msra.mxu0 0.0
  %2243 = vmatprep.subr.mxu0 0.0
  %2244 = vmatpush2.msra.mxu0 0.0
  %2245 = vmatprep.subr.mxu0 0.0
  %2246 = vmatpush2.msra.mxu0 0.0
  %2247 = vmatprep.subr.mxu0 0.0
  %2248 = vmatpush2.msra.mxu0 0.0
  %2249 = vmatprep.subr.mxu0 0.0
  %2250 = vmatpush2.msra.mxu0 0.0
  %2251 = vmatprep.subr.mxu0 0.0
  %2252 = vmatpush2.msra.mxu0 0.0
  %2253 = vmatprep.subr.mxu0 0.0
  %2254 = vmatpush2.msra.mxu0 0.0
  %2255 = vmatprep.subr.mxu0 0.0
  %2256 = vmatpush2.msra.mxu0 0.0
  %2257 = vmatprep.subr.mxu0 0.0
  %2258 = vmatpush2.msra.mxu0 0.0
  %2259 = vmatprep.mubr.f32.mxu0 0.0
  %2260 = vmatmul.mubr.f32.gmra.mxu0 %v434
  %v2261 = vpop.f32.mrf.mxu0
  %v2262 = vadd.f32 %v1686, %v2261
  %v2263 = vpop.f32.mrf.mxu0
  %2264 = vdwg.mxu0
  %2265 = vmatprep.subr.mxu0 0.0
  %2266 = vmatpush1.msra.mxu0 0.0
  %2267 = vmatprep.subr.mxu0 0.0
  %2268 = vmatpush1.msra.mxu0 0.0
  %2269 = vmatprep.subr.mxu0 0.0
  %2270 = vmatpush1.msra.mxu0 0.0
  %2271 = vmatprep.subr.mxu0 0.0
  %2272 = vmatpush1.msra.mxu0 0.0
  %2273 = vmatprep.subr.mxu0 0.0
  %2274 = vmatpush1.msra.mxu0 0.0
  %2275 = vmatprep.subr.mxu0 0.0
  %2276 = vmatpush1.msra.mxu0 0.0
  %2277 = vmatprep.subr.mxu0 0.0
  %2278 = vmatpush1.msra.mxu0 0.0
  %2279 = vmatprep.subr.mxu0 0.0
  %2280 = vmatpush1.msra.mxu0 0.0
  %2281 = vmatprep.subr.mxu0 0.0
  %2282 = vmatpush1.msra.mxu0 0.0
  %2283 = vmatprep.subr.mxu0 0.0
  %2284 = vmatpush1.msra.mxu0 0.0
  %2285 = vmatprep.subr.mxu0 0.0
  %2286 = vmatpush1.msra.mxu0 0.0
  %2287 = vmatprep.subr.mxu0 0.0
  %2288 = vmatpush1.msra.mxu0 0.0
  %2289 = vmatprep.subr.mxu0 0.0
  %2290 = vmatpush1.msra.mxu0 0.0
  %2291 = vmatprep.subr.mxu0 0.0
  %2292 = vmatpush1.msra.mxu0 0.0
  %2293 = vmatprep.subr.mxu0 0.0
  %2294 = vmatpush1.msra.mxu0 0.0
  %2295 = vmatprep.subr.mxu0 0.0
  %2296 = vmatpush1.msra.mxu0 %v1121
  %2297 = vmatprep.subr.mxu0 0.0
  %2298 = vmatpush2.msra.mxu0 0.0
  %2299 = vmatprep.subr.mxu0 0.0
  %2300 = vmatpush2.msra.mxu0 0.0
  %2301 = vmatprep.subr.mxu0 0.0
  %2302 = vmatpush2.msra.mxu0 0.0
  %2303 = vmatprep.subr.mxu0 0.0
  %2304 = vmatpush2.msra.mxu0 0.0
  %2305 = vmatprep.subr.mxu0 0.0
  %2306 = vmatpush2.msra.mxu0 0.0
  %2307 = vmatprep.subr.mxu0 0.0
  %2308 = vmatpush2.msra.mxu0 0.0
  %2309 = vmatprep.subr.mxu0 0.0
  %2310 = vmatpush2.msra.mxu0 0.0
  %2311 = vmatprep.subr.mxu0 0.0
  %2312 = vmatpush2.msra.mxu0 0.0
  %2313 = vmatprep.subr.mxu0 0.0
  %2314 = vmatpush2.msra.mxu0 0.0
  %2315 = vmatprep.subr.mxu0 0.0
  %2316 = vmatpush2.msra.mxu0 0.0
  %2317 = vmatprep.subr.mxu0 0.0
  %2318 = vmatpush2.msra.mxu0 0.0
  %2319 = vmatprep.subr.mxu0 0.0
  %2320 = vmatpush2.msra.mxu0 0.0
  %2321 = vmatprep.subr.mxu0 0.0
  %2322 = vmatpush2.msra.mxu0 0.0
  %2323 = vmatprep.subr.mxu0 0.0
  %2324 = vmatpush2.msra.mxu0 0.0
  %2325 = vmatprep.subr.mxu0 0.0
  %2326 = vmatpush2.msra.mxu0 0.0
  %2327 = vmatprep.subr.mxu0 0.0
  %2328 = vmatpush2.msra.mxu0 0.0
  %2329 = vmatprep.mubr.f32.mxu0 0.0
  %2330 = vmatmul.mubr.f32.gmra.mxu0 %v510
  %v2331 = vpop.f32.mrf.mxu0
  %v2332 = vadd.f32 %v1756, %v2331
  %v2333 = vpop.f32.mrf.mxu0
  %2334 = vdwg.mxu0
  %2335 = vmatprep.subr.mxu0 0.0
  %2336 = vmatpush1.msra.mxu0 0.0
  %2337 = vmatprep.subr.mxu0 0.0
  %2338 = vmatpush1.msra.mxu0 0.0
  %2339 = vmatprep.subr.mxu0 0.0
  %2340 = vmatpush1.msra.mxu0 0.0
  %2341 = vmatprep.subr.mxu0 0.0
  %2342 = vmatpush1.msra.mxu0 0.0
  %2343 = vmatprep.subr.mxu0 0.0
  %2344 = vmatpush1.msra.mxu0 0.0
  %2345 = vmatprep.subr.mxu0 0.0
  %2346 = vmatpush1.msra.mxu0 0.0
  %2347 = vmatprep.subr.mxu0 0.0
  %2348 = vmatpush1.msra.mxu0 0.0
  %2349 = vmatprep.subr.mxu0 0.0
  %2350 = vmatpush1.msra.mxu0 0.0
  %2351 = vmatprep.subr.mxu0 0.0
  %2352 = vmatpush1.msra.mxu0 0.0
  %2353 = vmatprep.subr.mxu0 0.0
  %2354 = vmatpush1.msra.mxu0 0.0
  %2355 = vmatprep.subr.mxu0 0.0
  %2356 = vmatpush1.msra.mxu0 0.0
  %2357 = vmatprep.subr.mxu0 0.0
  %2358 = vmatpush1.msra.mxu0 0.0
  %2359 = vmatprep.subr.mxu0 0.0
  %2360 = vmatpush1.msra.mxu0 0.0
  %2361 = vmatprep.subr.mxu0 0.0
  %2362 = vmatpush1.msra.mxu0 0.0
  %2363 = vmatprep.subr.mxu0 0.0
  %2364 = vmatpush1.msra.mxu0 0.0
  %2365 = vmatprep.subr.mxu0 0.0
  %2366 = vmatpush1.msra.mxu0 %v1197
  %2367 = vmatprep.subr.mxu0 0.0
  %2368 = vmatpush2.msra.mxu0 0.0
  %2369 = vmatprep.subr.mxu0 0.0
  %2370 = vmatpush2.msra.mxu0 0.0
  %2371 = vmatprep.subr.mxu0 0.0
  %2372 = vmatpush2.msra.mxu0 0.0
  %2373 = vmatprep.subr.mxu0 0.0
  %2374 = vmatpush2.msra.mxu0 0.0
  %2375 = vmatprep.subr.mxu0 0.0
  %2376 = vmatpush2.msra.mxu0 0.0
  %2377 = vmatprep.subr.mxu0 0.0
  %2378 = vmatpush2.msra.mxu0 0.0
  %2379 = vmatprep.subr.mxu0 0.0
  %2380 = vmatpush2.msra.mxu0 0.0
  %2381 = vmatprep.subr.mxu0 0.0
  %2382 = vmatpush2.msra.mxu0 0.0
  %2383 = vmatprep.subr.mxu0 0.0
  %2384 = vmatpush2.msra.mxu0 0.0
  %2385 = vmatprep.subr.mxu0 0.0
  %2386 = vmatpush2.msra.mxu0 0.0
  %2387 = vmatprep.subr.mxu0 0.0
  %2388 = vmatpush2.msra.mxu0 0.0
  %2389 = vmatprep.subr.mxu0 0.0
  %2390 = vmatpush2.msra.mxu0 0.0
  %2391 = vmatprep.subr.mxu0 0.0
  %2392 = vmatpush2.msra.mxu0 0.0
  %2393 = vmatprep.subr.mxu0 0.0
  %2394 = vmatpush2.msra.mxu0 0.0
  %2395 = vmatprep.subr.mxu0 0.0
  %2396 = vmatpush2.msra.mxu0 0.0
  %2397 = vmatprep.subr.mxu0 0.0
  %2398 = vmatpush2.msra.mxu0 0.0
  %2399 = vmatprep.mubr.f32.mxu0 0.0
  %2400 = vmatmul.mubr.f32.gmra.mxu0 %v586
  %v2401 = vpop.f32.mrf.mxu0
  %v2402 = vadd.f32 %v1826, %v2401
  %v2403 = vpop.f32.mrf.mxu0
  %2404 = vdwg.mxu0
  %2405 = vst.msk [vmem:[%s5] sm:$0xff] %vm51, %v1912
  %2406 = vst.msk [vmem:[%s5 + $0x8] sm:$0xff] %vm51, %v1982
  %2407 = vst.msk [vmem:[%s5 + $0x10] sm:$0xff] %vm51, %v2052
  %2408 = vst.msk [vmem:[%s5 + $0x18] sm:$0xff] %vm51, %v2122
  %2409 = vst.msk [vmem:[%s5 + $0x20] sm:$0xff] %vm51, %v2192
  %2410 = vst.msk [vmem:[%s5 + $0x28] sm:$0xff] %vm51, %v2262
  %2411 = vst.msk [vmem:[%s5 + $0x30] sm:$0xff] %vm51, %v2332
  %2412 = vst.msk [vmem:[%s5 + $0x38] sm:$0xff] %vm51, %v2402
  // Predicated region
  $region18: #{tpu_custom_call.1} parent=0 // pred_check
    _
  $region19: #{tpu_custom_call.1} parent=0 // pred_check_branch
    %2414 = sbr.rel (0) target = $region21
  $region20: #{tpu_custom_call.1} parent=0 // pred_region
    _
  $region21: #{tpu_custom_call.1} parent=0 // pred_fallthru
    _
  // Predicated region
  $region22: #{tpu_custom_call.1} parent=0 // pred_check
    _
  $region23: #{tpu_custom_call.1} parent=0 // pred_check_branch
    %2416 = sbr.rel (0) target = $region25
  $region24: #{tpu_custom_call.1} parent=0 // pred_region
    _
  $region25: #{tpu_custom_call.1} parent=0 // pred_fallthru
    _
  // Predicated region
  $region26: #{tpu_custom_call.1} parent=0 // pred_check
    _
  $region27: #{tpu_custom_call.1} parent=0 // pred_check_branch
    %2418 = sbr.rel (0) target = $region29
  $region28: #{tpu_custom_call.1} parent=0 // pred_region
    _
  $region29: #{tpu_custom_call.1} parent=0 // pred_fallthru
    _
  // Predicated region
  $region30: #{tpu_custom_call.1} parent=0 // pred_check
    _
  $region31: #{tpu_custom_call.1} parent=0 // pred_check_branch
    %2420 = sbr.rel (0) target = $region33
  $region32: #{tpu_custom_call.1} parent=0 // pred_region
    _
  $region33: #{tpu_custom_call.1} parent=0 // pred_fallthru
    _

</llo_original>
